<compile_context>
chip_gen: v6e
topology: v6e:2x2x1
jax: 0.10.0
libtpu: 0.0.40
codegen_flags: <defaults>
</compile_context>

<pallas_src>
import numpy as np
import jax
import jax.numpy as jnp
from jax.experimental import pallas as pl
from jax.experimental.pallas import tpu as pltpu

EPS = 1e-5


def _inst_norm(h):
    """Full-row InstanceNorm (biased variance, eps=1e-5), one pass, clamped."""
    inv_n = jnp.float32(1.0 / h.shape[-1])
    mu = jnp.sum(h, axis=-1, keepdims=True) * inv_n
    ms = jnp.sum(h * h, axis=-1, keepdims=True) * inv_n
    var = jnp.maximum(ms - mu * mu, 0.0)
    return (h - mu) * jax.lax.rsqrt(var + EPS)


def _block_inst_norm(h, mblk):
    """InstanceNorm over disjoint lane segments.

    mblk[f, g] = 1/seg_len if f and g belong to the same segment else 0, so a
    single MXU matmul yields the segment mean already broadcast to full width.
    Keeps cross-lane reductions off the XLU and avoids sub-vreg lane slicing /
    re-concatenation for the 64-lane per-expert segments.
    """
    mu = jnp.dot(h, mblk, preferred_element_type=jnp.float32)
    ms = jnp.dot(h * h, mblk, preferred_element_type=jnp.float32)
    var = jnp.maximum(ms - mu * mu, 0.0)
    return (h - mu) * jax.lax.rsqrt(var + EPS)


def _gelu_tanh(x):
    c = jnp.sqrt(2.0 / jnp.pi).astype(x.dtype)
    return 0.5 * x * (1.0 + jnp.tanh(c * (x + 0.044715 * x * x * x)))


def dynamic_expert_kernel(x_ref,
                          wg1_ref, bg1_ref,       # gate fc1           [D, GH], [1, GH]
                          wg2p_ref, bg2p_ref,     # packed gate slab   [GH, PACK]
                          wg2x_ref, bg2x_ref,     # gate expanded H2   [GH, E*H2]
                          w1a_ref, b1a_ref,       # expert layer 1     [D, E*H1]
                          w2b_ref, b2a_ref,       # block-diag layer 2 [E*H1, E*H2]
                          w3p_ref,                # fc3+mapper packed  [E*H2, PACK]
                          m1_ref, m2_ref,         # segment-mean mats
                          pack_ref):
    x = x_ref[...]

    # --- Gate: Linear -> InstanceNorm -> gelu(tanh); dropout == identity ---
    g = jnp.dot(x, wg1_ref[...], preferred_element_type=jnp.float32) + bg1_ref[...]
    g = _gelu_tanh(_inst_norm(g))

    # gate_slab lanes [0,C): sum_e gate_e * b3m_e (gated fc3+mapper bias, folded
    # in prepare_params); lanes [C,C+E): the gate logits; remaining lanes zero.
    gate_slab = jnp.dot(g, wg2p_ref[...], preferred_element_type=jnp.float32) + bg2p_ref[...]
    # gate expanded along lanes: column e*H2+j carries gate_e.
    gate_x = jnp.dot(g, wg2x_ref[...], preferred_element_type=jnp.float32) + bg2x_ref[...]

    # --- Expert layer 1: all experts in one matmul, segmented IN + ReLU ---
    h = jnp.dot(x, w1a_ref[...], preferred_element_type=jnp.float32) + b1a_ref[...]
    h = jnp.maximum(_block_inst_norm(h, m1_ref[...]), 0.0)

    # --- Expert layer 2: one block-diagonal matmul, segmented IN + ReLU ---
    h = jnp.dot(h, w2b_ref[...], preferred_element_type=jnp.float32) + b2a_ref[...]
    h = jnp.maximum(_block_inst_norm(h, m2_ref[...]), 0.0)

    # --- fc3 + mapper with the gate folded into the contraction:
    #     sum_e gate_e * (r2_e @ w3m_e)  ==  (gate_x * r2_all) @ W3_pack  ---
    out_slab = jnp.dot(gate_x * h, w3p_ref[...], preferred_element_type=jnp.float32)

    # One unmasked full-width (lane-dense) store: [out | gate | zeros].
    pack_ref[...] = out_slab + gate_slab


def prepare_params(p):
    """One-time weight folding (run at parameter-load/init time, not per call)."""
    wg1 = np.asarray(p["wg1"], np.float32)
    bg1 = np.asarray(p["bg1"], np.float32)
    wg2 = np.asarray(p["wg2"], np.float32)
    bg2 = np.asarray(p["bg2"], np.float32)
    w1 = np.asarray(p["w1"], np.float32)
    b1 = np.asarray(p["b1"], np.float32)
    w2 = np.asarray(p["w2"], np.float32)
    b2 = np.asarray(p["b2"], np.float32)
    w3 = np.asarray(p["w3"], np.float32)
    b3 = np.asarray(p["b3"], np.float32)
    wm = np.asarray(p["wm"], np.float32)

    D, GH = wg1.shape
    E, _, H1 = w1.shape
    H2 = w2.shape[-1]
    C = wm.shape[-1]
    PACK = max(128, ((C + E + 127) // 128) * 128)

    # fc3 + mapper fold:  o_e = r2_e @ w3m[e] + b3m[e]
    w3m = np.einsum("ehn,enc->ehc", w3, wm)          # [E, H2, C]
    b3m = np.einsum("ein,enc->ec", b3, wm)           # [E, C]

    # Expert layer 1 fused along lanes (expert-major).
    w1a = np.transpose(w1, (1, 0, 2)).reshape(D, E * H1)
    b1a = b1.reshape(1, E * H1)

    # Expert layer 2 as one block-diagonal matmul.
    w2b = np.zeros((E * H1, E * H2), np.float32)
    for e in range(E):
        w2b[e * H1:(e + 1) * H1, e * H2:(e + 1) * H2] = w2[e]
    b2a = b2.reshape(1, E * H2)

    # fc3+mapper packed directly into output lanes [0, C).
    w3p = np.zeros((E * H2, PACK), np.float32)
    for e in range(E):
        w3p[e * H2:(e + 1) * H2, :C] = w3m[e]

    # Packed gate slab weight: gated fc3 bias at lanes [0,C), gate logits at [C,C+E).
    wg2p = np.zeros((GH, PACK), np.float32)
    bg2p = np.zeros((1, PACK), np.float32)
    wg2p[:, :C] = wg2 @ b3m
    wg2p[:, C:C + E] = wg2
    bg2p[:, :C] = bg2 @ b3m
    bg2p[:, C:C + E] = bg2

    # Gate expanded along H2 lanes (lane e*H2+j == gate_e).
    expand = np.kron(np.eye(E, dtype=np.float32), np.ones((1, H2), np.float32))
    wg2x = wg2 @ expand                              # [GH, E*H2]
    bg2x = bg2 @ expand                              # [1, E*H2]

    # Block-mean matrices for segmented InstanceNorm (MXU reductions).
    m1 = np.kron(np.eye(E, dtype=np.float32), np.full((H1, H1), 1.0 / H1, np.float32))
    m2 = np.kron(np.eye(E, dtype=np.float32), np.full((H2, H2), 1.0 / H2, np.float32))

    folded = dict(wg1=wg1, bg1=bg1, wg2p=wg2p, bg2p=bg2p, wg2x=wg2x, bg2x=bg2x,
                  w1a=w1a, b1a=b1a, w2b=w2b, b2a=b2a, w3p=w3p, m1=m1, m2=m2)
    folded = {k: jnp.asarray(v) for k, v in folded.items()}
    folded.update(n_experts=E, n_cls=C, pack=PACK, d_in=D)
    return folded


def _default_tile_b(B):
    kind = ""
    try:
        kind = jax.devices()[0].device_kind.lower()
    except Exception:
        pass
    is_v7 = "v7" in kind
    # Cap the tile so batch DMAs pipeline behind compute as B scales;
    # v7x has half the VMEM (64 MiB physical / 32 MiB scoped default).
    cap = 512 if is_v7 else 1024
    tile = min(B, cap)
    while B % tile:
        tile -= 1
    # On v7x keep >= 2 parallel grid steps so the batch axis shards across
    # both TensorCores (grid=1 leaves one TC idle).
    if is_v7 and B // tile < 2 and B % 2 == 0 and B >= 16:
        tile = B // 2
        while B % tile:
            tile -= 1
    return max(tile, 1)


def dynamic_expert_forward(x, folded, *, tile_b=None):
    B, D = x.shape
    C, E, PACK = folded["n_cls"], folded["n_experts"], folded["pack"]
    if tile_b is None:
        tile_b = _default_tile_b(B)
    assert B % tile_b == 0

    names = ["wg1", "bg1", "wg2p", "bg2p", "wg2x", "bg2x",
             "w1a", "b1a", "w2b", "b2a", "w3p", "m1", "m2"]
    args = [folded[n] for n in names]

    in_specs = [pl.BlockSpec((tile_b, D), lambda i: (i, 0))]
    in_specs += [pl.BlockSpec(a.shape, lambda i: (0, 0)) for a in args]
    out_specs = pl.BlockSpec((tile_b, PACK), lambda i: (i, 0))

    # Explicit VMEM limit only when we would exceed the v5e 16 MiB scoped default.
    weight_bytes = sum(int(np.prod(a.shape)) * 4 for a in args)
    step_bytes = 4 * tile_b * (D + PACK)
    vmem_needed = 2 * weight_bytes + 2 * step_bytes + (2 << 20)
    vmem_limit = int(vmem_needed) if vmem_needed > (16 << 20) else None

    packed = pl.pallas_call(
        dynamic_expert_kernel,
        out_shape=jax.ShapeDtypeStruct((B, PACK), jnp.float32),
        grid=(B // tile_b,),
        in_specs=in_specs,
        out_specs=out_specs,
        compiler_params=pltpu.CompilerParams(
            dimension_semantics=("parallel",),
            vmem_limit_bytes=vmem_limit),
    )(x, *args)

    return packed[:, :C], packed[:, C:C + E]


# ---------------- pure-JAX reference (original unfused math, for validation) ----
def reference_forward(x, p):
    def inst_norm_ref(h):
        mu = jnp.mean(h, axis=-1, keepdims=True)
        var = jnp.mean((h - mu) ** 2, axis=-1, keepdims=True)
        return (h - mu) * jax.lax.rsqrt(var + EPS)

    g = x @ p["wg1"] + p["bg1"]
    g = _gelu_tanh(inst_norm_ref(g))
    gate = g @ p["wg2"] + p["bg2"]
    E = p["w1"].shape[0]
    outs = []
    for e in range(E):
        h = jnp.maximum(inst_norm_ref(x @ p["w1"][e] + p["b1"][e]), 0.0)
        h = jnp.maximum(inst_norm_ref(h @ p["w2"][e] + p["b2"][e]), 0.0)
        o = (h @ p["w3"][e] + p["b3"][e]) @ p["wm"][e]
        outs.append(o)
    stacked = jnp.stack(outs, axis=1)                      # [B, E, C]
    out = jnp.squeeze(gate[:, None, :] @ stacked, axis=1)  # [B, C]
    return out, gate


def make_params(key, *, input_size, hidden1, hidden2, gate_hidden,
                num_experts, new_cls):
    total_cls = num_experts * new_cls
    ks = jax.random.split(key, 16)

    def xavier(k, shape):
        fan_in, fan_out = shape[-2], shape[-1]
        lim = np.sqrt(6.0 / (fan_in + fan_out))
        return jax.random.uniform(k, shape, jnp.float32, -lim, lim)

    p = {
        # Gate
        "wg1": xavier(ks[0], (input_size, gate_hidden)),
        "bg1": 0.01 * jax.random.normal(ks[1], (1, gate_hidden), jnp.float32),
        "wg2": xavier(ks[2], (gate_hidden, num_experts)),
        "bg2": 0.01 * jax.random.normal(ks[3], (1, num_experts), jnp.float32),
        # Experts (stacked on leading expert axis)
        "w1": xavier(ks[4], (num_experts, input_size, hidden1)),
        "b1": 0.01 * jax.random.normal(ks[5], (num_experts, 1, hidden1), jnp.float32),
        "w2": xavier(ks[6], (num_experts, hidden1, hidden2)),
        "b2": 0.01 * jax.random.normal(ks[7], (num_experts, 1, hidden2), jnp.float32),
        "w3": xavier(ks[8], (num_experts, hidden2, new_cls)),
        "b3": 0.01 * jax.random.normal(ks[9], (num_experts, 1, new_cls), jnp.float32),
    }
    # Mapper after expand_expert: per-expert [new_cls, total_cls], bias-free,
    # only the expert's own class slice is non-zero.
    wm = np.zeros((num_experts, new_cls, total_cls), np.float32)
    mk = jax.random.split(ks[10], num_experts)
    for e in range(num_experts):
        wm[e, :, e * new_cls:(e + 1) * new_cls] = np.asarray(
            xavier(mk[e], (new_cls, new_cls)))
    p["wm"] = jnp.asarray(wm)
    return p


if __name__ == "__main__":
    B, D = 16, 32
    H1, H2, GH = 128, 64, 256
    E, NEW_CLS = 2, 2

    key = jax.random.PRNGKey(0)
    kx, kp = jax.random.split(key)
    x = jax.random.normal(kx, (B, D), jnp.float32)
    params = make_params(kp, input_size=D, hidden1=H1, hidden2=H2,
                         gate_hidden=GH, num_experts=E, new_cls=NEW_CLS)

    folded = prepare_params(params)                  # one-time weight folding
    out, gate = dynamic_expert_forward(x, folded)
    out, gate = jax.block_until_ready((out, gate))

    ref_out, ref_gate = reference_forward(x, params)
    np.testing.assert_allclose(np.asarray(out), np.asarray(ref_out),
                               rtol=1e-4, atol=1e-4)
    np.testing.assert_allclose(np.asarray(gate), np.asarray(ref_gate),
                               rtol=1e-4, atol=1e-4)
    print("KERNEL_OK")
</pallas_src>

<mosaic_0001>
module attributes {stable_mosaic.version = 11 : i64} {
  func.func @dynamic_expert_kernel(%arg0: i32, %arg1: memref<16x32xf32, #tpu.memory_space<vmem>>, %arg2: memref<32x256xf32, #tpu.memory_space<vmem>>, %arg3: memref<1x256xf32, #tpu.memory_space<vmem>>, %arg4: memref<256x128xf32, #tpu.memory_space<vmem>>, %arg5: memref<1x128xf32, #tpu.memory_space<vmem>>, %arg6: memref<256x128xf32, #tpu.memory_space<vmem>>, %arg7: memref<1x128xf32, #tpu.memory_space<vmem>>, %arg8: memref<32x256xf32, #tpu.memory_space<vmem>>, %arg9: memref<1x256xf32, #tpu.memory_space<vmem>>, %arg10: memref<256x128xf32, #tpu.memory_space<vmem>>, %arg11: memref<1x128xf32, #tpu.memory_space<vmem>>, %arg12: memref<128x128xf32, #tpu.memory_space<vmem>>, %arg13: memref<256x256xf32, #tpu.memory_space<vmem>>, %arg14: memref<128x128xf32, #tpu.memory_space<vmem>>, %arg15: memref<16x128xf32, #tpu.memory_space<vmem>>) attributes {dimension_semantics = [#tpu.dimension_semantics<parallel>], iteration_bounds = array<i64: 1>, scalar_prefetch = 0 : i64, scratch_operands = 0 : i64, tpu.core_type = #tpu.core_type<tc>, window_params = [{transform_indices = @transform_0, window_bounds = array<i64: 16, 32>}, {pipeline_mode = #tpu.pipeline_mode<synchronous>, transform_indices = @transform_1, window_bounds = array<i64: 32, 256>}, {pipeline_mode = #tpu.pipeline_mode<synchronous>, transform_indices = @transform_2, window_bounds = array<i64: 1, 256>}, {pipeline_mode = #tpu.pipeline_mode<synchronous>, transform_indices = @transform_3, window_bounds = array<i64: 256, 128>}, {pipeline_mode = #tpu.pipeline_mode<synchronous>, transform_indices = @transform_4, window_bounds = array<i64: 1, 128>}, {pipeline_mode = #tpu.pipeline_mode<synchronous>, transform_indices = @transform_5, window_bounds = array<i64: 256, 128>}, {pipeline_mode = #tpu.pipeline_mode<synchronous>, transform_indices = @transform_6, window_bounds = array<i64: 1, 128>}, {pipeline_mode = #tpu.pipeline_mode<synchronous>, transform_indices = @transform_7, window_bounds = array<i64: 32, 256>}, {pipeline_mode = #tpu.pipeline_mode<synchronous>, transform_indices = @transform_8, window_bounds = array<i64: 1, 256>}, {pipeline_mode = #tpu.pipeline_mode<synchronous>, transform_indices = @transform_9, window_bounds = array<i64: 256, 128>}, {pipeline_mode = #tpu.pipeline_mode<synchronous>, transform_indices = @transform_10, window_bounds = array<i64: 1, 128>}, {pipeline_mode = #tpu.pipeline_mode<synchronous>, transform_indices = @transform_11, window_bounds = array<i64: 128, 128>}, {pipeline_mode = #tpu.pipeline_mode<synchronous>, transform_indices = @transform_12, window_bounds = array<i64: 256, 256>}, {pipeline_mode = #tpu.pipeline_mode<synchronous>, transform_indices = @transform_13, window_bounds = array<i64: 128, 128>}, {transform_indices = @transform_14, window_bounds = array<i64: 16, 128>}]} {
    %c0 = arith.constant 0 : index
    %c0_0 = arith.constant 0 : index
    %0 = vector.load %arg1[%c0, %c0_0] : memref<16x32xf32, #tpu.memory_space<vmem>>, vector<16x32xf32>
    %c0_1 = arith.constant 0 : index
    %c0_2 = arith.constant 0 : index
    %1 = vector.load %arg2[%c0_1, %c0_2] : memref<32x256xf32, #tpu.memory_space<vmem>>, vector<32x256xf32>
    %cst = arith.constant dense<0.000000e+00> : vector<16x256xf32>
    %2 = tpu.matmul %0, %1, %cst {dimension_numbers = #tpu.dot_dimension_numbers<[1], [0], [0], [1], [0, 0, 1, 1], [], []>} : vector<16x32xf32>, vector<32x256xf32>, vector<16x256xf32> -> vector<16x256xf32>
    %c0_3 = arith.constant 0 : index
    %c0_4 = arith.constant 0 : index
    %3 = vector.load %arg3[%c0_3, %c0_4] : memref<1x256xf32, #tpu.memory_space<vmem>>, vector<1x256xf32>
    %4 = vector.broadcast %3 : vector<1x256xf32> to vector<16x256xf32>
    %5 = arith.addf %2, %4 : vector<16x256xf32>
    %cst_5 = arith.constant dense<0.000000e+00> : vector<16xf32>
    %6 = vector.multi_reduction <add>, %5, %cst_5 [1] : vector<16x256xf32> to vector<16xf32>
    %7 = vector.shape_cast %6 : vector<16xf32> to vector<16x1xf32>
    %cst_6 = arith.constant 3.906250e-03 : f32
    %8 = vector.broadcast %cst_6 : f32 to vector<16x1xf32>
    %9 = arith.mulf %7, %8 : vector<16x1xf32>
    %10 = arith.mulf %5, %5 : vector<16x256xf32>
    %cst_7 = arith.constant dense<0.000000e+00> : vector<16xf32>
    %11 = vector.multi_reduction <add>, %10, %cst_7 [1] : vector<16x256xf32> to vector<16xf32>
    %12 = vector.shape_cast %11 : vector<16xf32> to vector<16x1xf32>
    %cst_8 = arith.constant 3.906250e-03 : f32
    %13 = vector.broadcast %cst_8 : f32 to vector<16x1xf32>
    %14 = arith.mulf %12, %13 : vector<16x1xf32>
    %15 = arith.mulf %9, %9 : vector<16x1xf32>
    %16 = arith.subf %14, %15 : vector<16x1xf32>
    %cst_9 = arith.constant 0.000000e+00 : f32
    %17 = vector.broadcast %cst_9 : f32 to vector<16x1xf32>
    %18 = arith.maximumf %16, %17 : vector<16x1xf32>
    %19 = vector.broadcast %9 : vector<16x1xf32> to vector<16x256xf32>
    %20 = arith.subf %5, %19 : vector<16x256xf32>
    %cst_10 = arith.constant 9.99999974E-6 : f32
    %21 = vector.broadcast %cst_10 : f32 to vector<16x1xf32>
    %22 = arith.addf %18, %21 : vector<16x1xf32>
    %23 = math.rsqrt %22 : vector<16x1xf32>
    %24 = vector.broadcast %23 : vector<16x1xf32> to vector<16x256xf32>
    %25 = arith.mulf %20, %24 : vector<16x256xf32>
    %cst_11 = arith.constant 0.636619746 : f32
    %26 = math.sqrt %cst_11 : f32
    %cst_12 = arith.constant 5.000000e-01 : f32
    %27 = vector.broadcast %cst_12 : f32 to vector<16x256xf32>
    %28 = arith.mulf %27, %25 : vector<16x256xf32>
    %cst_13 = arith.constant 4.471500e-02 : f32
    %29 = vector.broadcast %cst_13 : f32 to vector<16x256xf32>
    %30 = arith.mulf %29, %25 : vector<16x256xf32>
    %31 = arith.mulf %30, %25 : vector<16x256xf32>
    %32 = arith.mulf %31, %25 : vector<16x256xf32>
    %33 = arith.addf %25, %32 : vector<16x256xf32>
    %34 = vector.broadcast %26 : f32 to vector<16x256xf32>
    %35 = arith.mulf %34, %33 : vector<16x256xf32>
    %36 = math.tanh %35 : vector<16x256xf32>
    %cst_14 = arith.constant 1.000000e+00 : f32
    %37 = vector.broadcast %cst_14 : f32 to vector<16x256xf32>
    %38 = arith.addf %37, %36 : vector<16x256xf32>
    %39 = arith.mulf %28, %38 : vector<16x256xf32>
    %c0_15 = arith.constant 0 : index
    %c0_16 = arith.constant 0 : index
    %40 = vector.load %arg4[%c0_15, %c0_16] : memref<256x128xf32, #tpu.memory_space<vmem>>, vector<256x128xf32>
    %cst_17 = arith.constant dense<0.000000e+00> : vector<16x128xf32>
    %41 = tpu.matmul %39, %40, %cst_17 {dimension_numbers = #tpu.dot_dimension_numbers<[1], [0], [0], [1], [0, 0, 1, 1], [], []>} : vector<16x256xf32>, vector<256x128xf32>, vector<16x128xf32> -> vector<16x128xf32>
    %c0_18 = arith.constant 0 : index
    %c0_19 = arith.constant 0 : index
    %42 = vector.load %arg5[%c0_18, %c0_19] : memref<1x128xf32, #tpu.memory_space<vmem>>, vector<1x128xf32>
    %43 = vector.broadcast %42 : vector<1x128xf32> to vector<16x128xf32>
    %44 = arith.addf %41, %43 : vector<16x128xf32>
    %c0_20 = arith.constant 0 : index
    %c0_21 = arith.constant 0 : index
    %45 = vector.load %arg6[%c0_20, %c0_21] : memref<256x128xf32, #tpu.memory_space<vmem>>, vector<256x128xf32>
    %cst_22 = arith.constant dense<0.000000e+00> : vector<16x128xf32>
    %46 = tpu.matmul %39, %45, %cst_22 {dimension_numbers = #tpu.dot_dimension_numbers<[1], [0], [0], [1], [0, 0, 1, 1], [], []>} : vector<16x256xf32>, vector<256x128xf32>, vector<16x128xf32> -> vector<16x128xf32>
    %c0_23 = arith.constant 0 : index
    %c0_24 = arith.constant 0 : index
    %47 = vector.load %arg7[%c0_23, %c0_24] : memref<1x128xf32, #tpu.memory_space<vmem>>, vector<1x128xf32>
    %48 = vector.broadcast %47 : vector<1x128xf32> to vector<16x128xf32>
    %49 = arith.addf %46, %48 : vector<16x128xf32>
    %c0_25 = arith.constant 0 : index
    %c0_26 = arith.constant 0 : index
    %50 = vector.load %arg8[%c0_25, %c0_26] : memref<32x256xf32, #tpu.memory_space<vmem>>, vector<32x256xf32>
    %cst_27 = arith.constant dense<0.000000e+00> : vector<16x256xf32>
    %51 = tpu.matmul %0, %50, %cst_27 {dimension_numbers = #tpu.dot_dimension_numbers<[1], [0], [0], [1], [0, 0, 1, 1], [], []>} : vector<16x32xf32>, vector<32x256xf32>, vector<16x256xf32> -> vector<16x256xf32>
    %c0_28 = arith.constant 0 : index
    %c0_29 = arith.constant 0 : index
    %52 = vector.load %arg9[%c0_28, %c0_29] : memref<1x256xf32, #tpu.memory_space<vmem>>, vector<1x256xf32>
    %53 = vector.broadcast %52 : vector<1x256xf32> to vector<16x256xf32>
    %54 = arith.addf %51, %53 : vector<16x256xf32>
    %c0_30 = arith.constant 0 : index
    %c0_31 = arith.constant 0 : index
    %55 = vector.load %arg13[%c0_30, %c0_31] : memref<256x256xf32, #tpu.memory_space<vmem>>, vector<256x256xf32>
    %cst_32 = arith.constant dense<0.000000e+00> : vector<16x256xf32>
    %56 = tpu.matmul %54, %55, %cst_32 {dimension_numbers = #tpu.dot_dimension_numbers<[1], [0], [0], [1], [0, 0, 1, 1], [], []>} : vector<16x256xf32>, vector<256x256xf32>, vector<16x256xf32> -> vector<16x256xf32>
    %57 = arith.mulf %54, %54 : vector<16x256xf32>
    %cst_33 = arith.constant dense<0.000000e+00> : vector<16x256xf32>
    %58 = tpu.matmul %57, %55, %cst_33 {dimension_numbers = #tpu.dot_dimension_numbers<[1], [0], [0], [1], [0, 0, 1, 1], [], []>} : vector<16x256xf32>, vector<256x256xf32>, vector<16x256xf32> -> vector<16x256xf32>
    %59 = arith.mulf %56, %56 : vector<16x256xf32>
    %60 = arith.subf %58, %59 : vector<16x256xf32>
    %cst_34 = arith.constant 0.000000e+00 : f32
    %61 = vector.broadcast %cst_34 : f32 to vector<16x256xf32>
    %62 = arith.maximumf %60, %61 : vector<16x256xf32>
    %63 = arith.subf %54, %56 : vector<16x256xf32>
    %cst_35 = arith.constant 9.99999974E-6 : f32
    %64 = vector.broadcast %cst_35 : f32 to vector<16x256xf32>
    %65 = arith.addf %62, %64 : vector<16x256xf32>
    %66 = math.rsqrt %65 : vector<16x256xf32>
    %67 = arith.mulf %63, %66 : vector<16x256xf32>
    %cst_36 = arith.constant 0.000000e+00 : f32
    %68 = vector.broadcast %cst_36 : f32 to vector<16x256xf32>
    %69 = arith.maximumf %67, %68 : vector<16x256xf32>
    %c0_37 = arith.constant 0 : index
    %c0_38 = arith.constant 0 : index
    %70 = vector.load %arg10[%c0_37, %c0_38] : memref<256x128xf32, #tpu.memory_space<vmem>>, vector<256x128xf32>
    %cst_39 = arith.constant dense<0.000000e+00> : vector<16x128xf32>
    %71 = tpu.matmul %69, %70, %cst_39 {dimension_numbers = #tpu.dot_dimension_numbers<[1], [0], [0], [1], [0, 0, 1, 1], [], []>} : vector<16x256xf32>, vector<256x128xf32>, vector<16x128xf32> -> vector<16x128xf32>
    %c0_40 = arith.constant 0 : index
    %c0_41 = arith.constant 0 : index
    %72 = vector.load %arg11[%c0_40, %c0_41] : memref<1x128xf32, #tpu.memory_space<vmem>>, vector<1x128xf32>
    %73 = vector.broadcast %72 : vector<1x128xf32> to vector<16x128xf32>
    %74 = arith.addf %71, %73 : vector<16x128xf32>
    %c0_42 = arith.constant 0 : index
    %c0_43 = arith.constant 0 : index
    %75 = vector.load %arg14[%c0_42, %c0_43] : memref<128x128xf32, #tpu.memory_space<vmem>>, vector<128x128xf32>
    %cst_44 = arith.constant dense<0.000000e+00> : vector<16x128xf32>
    %76 = tpu.matmul %74, %75, %cst_44 {dimension_numbers = #tpu.dot_dimension_numbers<[1], [0], [0], [1], [0, 0, 1, 1], [], []>} : vector<16x128xf32>, vector<128x128xf32>, vector<16x128xf32> -> vector<16x128xf32>
    %77 = arith.mulf %74, %74 : vector<16x128xf32>
    %cst_45 = arith.constant dense<0.000000e+00> : vector<16x128xf32>
    %78 = tpu.matmul %77, %75, %cst_45 {dimension_numbers = #tpu.dot_dimension_numbers<[1], [0], [0], [1], [0, 0, 1, 1], [], []>} : vector<16x128xf32>, vector<128x128xf32>, vector<16x128xf32> -> vector<16x128xf32>
    %79 = arith.mulf %76, %76 : vector<16x128xf32>
    %80 = arith.subf %78, %79 : vector<16x128xf32>
    %cst_46 = arith.constant 0.000000e+00 : f32
    %81 = vector.broadcast %cst_46 : f32 to vector<16x128xf32>
    %82 = arith.maximumf %80, %81 : vector<16x128xf32>
    %83 = arith.subf %74, %76 : vector<16x128xf32>
    %cst_47 = arith.constant 9.99999974E-6 : f32
    %84 = vector.broadcast %cst_47 : f32 to vector<16x128xf32>
    %85 = arith.addf %82, %84 : vector<16x128xf32>
    %86 = math.rsqrt %85 : vector<16x128xf32>
    %87 = arith.mulf %83, %86 : vector<16x128xf32>
    %cst_48 = arith.constant 0.000000e+00 : f32
    %88 = vector.broadcast %cst_48 : f32 to vector<16x128xf32>
    %89 = arith.maximumf %87, %88 : vector<16x128xf32>
    %90 = arith.mulf %49, %89 : vector<16x128xf32>
    %c0_49 = arith.constant 0 : index
    %c0_50 = arith.constant 0 : index
    %91 = vector.load %arg12[%c0_49, %c0_50] : memref<128x128xf32, #tpu.memory_space<vmem>>, vector<128x128xf32>
    %cst_51 = arith.constant dense<0.000000e+00> : vector<16x128xf32>
    %92 = tpu.matmul %90, %91, %cst_51 {dimension_numbers = #tpu.dot_dimension_numbers<[1], [0], [0], [1], [0, 0, 1, 1], [], []>} : vector<16x128xf32>, vector<128x128xf32>, vector<16x128xf32> -> vector<16x128xf32>
    %93 = arith.addf %92, %44 : vector<16x128xf32>
    %c0_52 = arith.constant 0 : index
    %c0_53 = arith.constant 0 : index
    %94 = vector.load %arg15[%c0_52, %c0_53] : memref<16x128xf32, #tpu.memory_space<vmem>>, vector<16x128xf32>
    tpu.vector_store %arg15[%c0_52, %c0_53], %93 {strides = array<i32>} : memref<16x128xf32, #tpu.memory_space<vmem>>, vector<16x128xf32>,
    return
  }
  func.func @transform_0(%arg0: i32) -> (i32, i32) {
    %c0_i32 = arith.constant 0 : i32
    %c0_i32_0 = arith.constant 0 : i32
    return %arg0, %c0_i32 : i32, i32
  }
  func.func @transform_1(%arg0: i32) -> (i32, i32) {
    %c0_i32 = arith.constant 0 : i32
    %c0_i32_0 = arith.constant 0 : i32
    %c0_i32_1 = arith.constant 0 : i32
    return %c0_i32, %c0_i32_0 : i32, i32
  }
  func.func @transform_2(%arg0: i32) -> (i32, i32) {
    %c0_i32 = arith.constant 0 : i32
    %c0_i32_0 = arith.constant 0 : i32
    %c0_i32_1 = arith.constant 0 : i32
    return %c0_i32, %c0_i32_0 : i32, i32
  }
  func.func @transform_3(%arg0: i32) -> (i32, i32) {
    %c0_i32 = arith.constant 0 : i32
    %c0_i32_0 = arith.constant 0 : i32
    %c0_i32_1 = arith.constant 0 : i32
    return %c0_i32, %c0_i32_0 : i32, i32
  }
  func.func @transform_4(%arg0: i32) -> (i32, i32) {
    %c0_i32 = arith.constant 0 : i32
    %c0_i32_0 = arith.constant 0 : i32
    %c0_i32_1 = arith.constant 0 : i32
    return %c0_i32, %c0_i32_0 : i32, i32
  }
  func.func @transform_5(%arg0: i32) -> (i32, i32) {
    %c0_i32 = arith.constant 0 : i32
    %c0_i32_0 = arith.constant 0 : i32
    %c0_i32_1 = arith.constant 0 : i32
    return %c0_i32, %c0_i32_0 : i32, i32
  }
  func.func @transform_6(%arg0: i32) -> (i32, i32) {
    %c0_i32 = arith.constant 0 : i32
    %c0_i32_0 = arith.constant 0 : i32
    %c0_i32_1 = arith.constant 0 : i32
    return %c0_i32, %c0_i32_0 : i32, i32
  }
  func.func @transform_7(%arg0: i32) -> (i32, i32) {
    %c0_i32 = arith.constant 0 : i32
    %c0_i32_0 = arith.constant 0 : i32
    %c0_i32_1 = arith.constant 0 : i32
    return %c0_i32, %c0_i32_0 : i32, i32
  }
  func.func @transform_8(%arg0: i32) -> (i32, i32) {
    %c0_i32 = arith.constant 0 : i32
    %c0_i32_0 = arith.constant 0 : i32
    %c0_i32_1 = arith.constant 0 : i32
    return %c0_i32, %c0_i32_0 : i32, i32
  }
  func.func @transform_9(%arg0: i32) -> (i32, i32) {
    %c0_i32 = arith.constant 0 : i32
    %c0_i32_0 = arith.constant 0 : i32
    %c0_i32_1 = arith.constant 0 : i32
    return %c0_i32, %c0_i32_0 : i32, i32
  }
  func.func @transform_10(%arg0: i32) -> (i32, i32) {
    %c0_i32 = arith.constant 0 : i32
    %c0_i32_0 = arith.constant 0 : i32
    %c0_i32_1 = arith.constant 0 : i32
    return %c0_i32, %c0_i32_0 : i32, i32
  }
  func.func @transform_11(%arg0: i32) -> (i32, i32) {
    %c0_i32 = arith.constant 0 : i32
    %c0_i32_0 = arith.constant 0 : i32
    %c0_i32_1 = arith.constant 0 : i32
    return %c0_i32, %c0_i32_0 : i32, i32
  }
  func.func @transform_12(%arg0: i32) -> (i32, i32) {
    %c0_i32 = arith.constant 0 : i32
    %c0_i32_0 = arith.constant 0 : i32
    %c0_i32_1 = arith.constant 0 : i32
    return %c0_i32, %c0_i32_0 : i32, i32
  }
  func.func @transform_13(%arg0: i32) -> (i32, i32) {
    %c0_i32 = arith.constant 0 : i32
    %c0_i32_0 = arith.constant 0 : i32
    %c0_i32_1 = arith.constant 0 : i32
    return %c0_i32, %c0_i32_0 : i32, i32
  }
  func.func @transform_14(%arg0: i32) -> (i32, i32) {
    %c0_i32 = arith.constant 0 : i32
    %c0_i32_0 = arith.constant 0 : i32
    return %arg0, %c0_i32 : i32, i32
  }
}

</mosaic_0001>

<llo_original>
// kernel: tpu_custom_call.1
$region0: #{tpu_custom_call.1}
  #allocation0 [shape = 'u32[]', space=smem, size = 0x4, offset = 0x4, fixed_abs, tag = 'smem constant byte address 0x4 - core index']
  #allocation1 [shape = 'u32[144,128]{1,0:T(1,128)}', space=vmem, size = 0x12000, scoped, tag = 'internal scratch']
  %s0 = inlined_call_operand.hbm [shape: f32[16,32], index: 0, kind: input, shape index: {}]
  %s1 = inlined_call_operand.hbm [shape: f32[32,256], index: 1, kind: input, shape index: {}]
  %s2 = inlined_call_operand.vmem [shape: f32[1,256], index: 2, kind: input, shape index: {}]
  %s3 = inlined_call_operand.hbm [shape: f32[256,128], index: 3, kind: input, shape index: {}]
  %s4 = inlined_call_operand.vmem [shape: f32[1,128], index: 4, kind: input, shape index: {}]
  %s5 = inlined_call_operand.hbm [shape: f32[256,128], index: 5, kind: input, shape index: {}]
  %s6 = inlined_call_operand.vmem [shape: f32[1,128], index: 6, kind: input, shape index: {}]
  %s7 = inlined_call_operand.hbm [shape: f32[32,256], index: 7, kind: input, shape index: {}]
  %s8 = inlined_call_operand.vmem [shape: f32[1,256], index: 8, kind: input, shape index: {}]
  %s9 = inlined_call_operand.hbm [shape: f32[256,128], index: 9, kind: input, shape index: {}]
  %s10 = inlined_call_operand.vmem [shape: f32[1,128], index: 10, kind: input, shape index: {}]
  %s11 = inlined_call_operand.hbm [shape: f32[128,128], index: 11, kind: input, shape index: {}]
  %s12 = inlined_call_operand.hbm [shape: f32[256,256], index: 12, kind: input, shape index: {}]
  %s13 = inlined_call_operand.hbm [shape: f32[128,128], index: 13, kind: input, shape index: {}]
  %s14 = inlined_call_operand.hbm [shape: f32[16,128], index: 14, kind: output, shape index: {}]
  %s15 = sld [smem:[#allocation0]]
  $region102: #{tpu_custom_call.1} parent=0
    _
  %s17 = ssub.s32 1, %s15
  %s18 = scalar_select 0, %s17, %s15
  $region1: #{tpu_custom_call.1} parent=0
    #allocation2 [shape = 'u8[8192]{0}', space=vmem, size = 0x2000, scoped, tag = 'input window, operand 0, single buffered']
    #allocation3 [shape = 's32[1]{0}', space=sflag, size = 0x4, scoped, tag = 'scoped memory for tpu_custom_call.1']
    #allocation4 [shape = 's32[1]{0}', space=sflag, size = 0x4, scoped, tag = 'scoped memory for tpu_custom_call.1']
    #allocation5 [shape = 'u8[32768]{0}', space=vmem, size = 0x8000, scoped, tag = 'input window, operand 1, single buffered']
    #allocation6 [shape = 's32[1]{0}', space=sflag, size = 0x4, scoped, tag = 'scoped memory for tpu_custom_call.1']
    #allocation7 [shape = 'u8[131072]{0}', space=vmem, size = 0x20000, scoped, tag = 'input window, operand 3, single buffered']
    #allocation8 [shape = 'u8[131072]{0}', space=vmem, size = 0x20000, scoped, tag = 'input window, operand 5, single buffered']
    #allocation9 [shape = 's32[1]{0}', space=sflag, size = 0x4, scoped, tag = 'scoped memory for tpu_custom_call.1']
    #allocation10 [shape = 'u8[32768]{0}', space=vmem, size = 0x8000, scoped, tag = 'input window, operand 7, single buffered']
    #allocation11 [shape = 'u8[131072]{0}', space=vmem, size = 0x20000, scoped, tag = 'input window, operand 9, single buffered']
    #allocation12 [shape = 's32[1]{0}', space=sflag, size = 0x4, scoped, tag = 'scoped memory for tpu_custom_call.1']
    #allocation13 [shape = 'u8[65536]{0}', space=vmem, size = 0x10000, scoped, tag = 'input window, operand 11, single buffered']
    #allocation14 [shape = 'u8[262144]{0}', space=vmem, size = 0x40000, scoped, tag = 'input window, operand 12, single buffered']
    #allocation15 [shape = 's32[1]{0}', space=sflag, size = 0x4, scoped, tag = 'scoped memory for tpu_custom_call.1']
    #allocation16 [shape = 'u8[65536]{0}', space=vmem, size = 0x10000, scoped, tag = 'input window, operand 13, single buffered']
    #allocation17 [shape = 'u8[8192]{0}', space=vmem, size = 0x2000, scoped, tag = 'output window, operand 0, single buffered']
    %19 = vsyncpa [#allocation3], 0
    %20 = vsyncpa [#allocation6], 0
    %21 = vsyncpa [#allocation9], 0
    %22 = vsyncpa [#allocation12], 0
    %23 = vsyncpa [#allocation15], 0
    %24 = vsyncpa [#allocation4], 0
    // Predicated region
    $region2: #{tpu_custom_call.1} parent=1 // pred_check
      _
    $region3: #{tpu_custom_call.1} parent=1 // pred_check_branch
      %26 = sbr.rel (0) target = $region5
    $region4: #{tpu_custom_call.1} parent=1 // pred_region
      %s28 = ssub.s32 256, 256
      %29 = vsyncadd [#allocation3], %s28
      %s30 = sshll.u32 [#allocation2], 4
      %s31 = int_to_ptr.vmem [resolvable:$true] %s30
      %36 = dma.hbm_to_vmem [thread:$0]  %s0, 256, %s31, [#allocation3], 128, 128, 8
    $region5: #{tpu_custom_call.1} parent=1 // pred_fallthru
      _
    // Predicated region
    $region6: #{tpu_custom_call.1} parent=1 // pred_check
      _
    $region7: #{tpu_custom_call.1} parent=1 // pred_check_branch
      %38 = sbr.rel (0) target = $region9
    $region8: #{tpu_custom_call.1} parent=1 // pred_region
      %s40 = ssub.s32 1024, 1024
      %41 = vsyncadd [#allocation6], %s40
      %s42 = sshll.u32 [#allocation5], 4
      %s43 = int_to_ptr.vmem [resolvable:$true] %s42
      %48 = dma.hbm_to_vmem [thread:$0]  %s1, 1024, %s43, [#allocation6], 256, 256, 16
    $region9: #{tpu_custom_call.1} parent=1 // pred_fallthru
      _
    // Predicated region
    $region10: #{tpu_custom_call.1} parent=1 // pred_check
      _
    $region11: #{tpu_custom_call.1} parent=1 // pred_check_branch
      %50 = sbr.rel (0) target = $region13
    $region12: #{tpu_custom_call.1} parent=1 // pred_region
      _
    $region13: #{tpu_custom_call.1} parent=1 // pred_fallthru
      _
    // Predicated region
    $region14: #{tpu_custom_call.1} parent=1 // pred_check
      _
    $region15: #{tpu_custom_call.1} parent=1 // pred_check_branch
      %52 = sbr.rel (0) target = $region17
    $region16: #{tpu_custom_call.1} parent=1 // pred_region
      %s54 = ssub.s32 4096, 4096
      %55 = vsyncadd [#allocation6], %s54
      %s56 = sshll.u32 [#allocation7], 4
      %s57 = int_to_ptr.vmem [resolvable:$true] %s56
      %62 = dma.hbm_to_vmem [thread:$0]  %s3, 4096, %s57, [#allocation6], 128, 128, 8
    $region17: #{tpu_custom_call.1} parent=1 // pred_fallthru
      _
    // Predicated region
    $region18: #{tpu_custom_call.1} parent=1 // pred_check
      _
    $region19: #{tpu_custom_call.1} parent=1 // pred_check_branch
      %64 = sbr.rel (0) target = $region21
    $region20: #{tpu_custom_call.1} parent=1 // pred_region
      _
    $region21: #{tpu_custom_call.1} parent=1 // pred_fallthru
      _
    // Predicated region
    $region22: #{tpu_custom_call.1} parent=1 // pred_check
      _
    $region23: #{tpu_custom_call.1} parent=1 // pred_check_branch
      %66 = sbr.rel (0) target = $region25
    $region24: #{tpu_custom_call.1} parent=1 // pred_region
      %s68 = ssub.s32 4096, 4096
      %69 = vsyncadd [#allocation9], %s68
      %s70 = sshll.u32 [#allocation8], 4
      %s71 = int_to_ptr.vmem [resolvable:$true] %s70
      %76 = dma.hbm_to_vmem [thread:$0]  %s5, 4096, %s71, [#allocation9], 128, 128, 8
    $region25: #{tpu_custom_call.1} parent=1 // pred_fallthru
      _
    // Predicated region
    $region26: #{tpu_custom_call.1} parent=1 // pred_check
      _
    $region27: #{tpu_custom_call.1} parent=1 // pred_check_branch
      %78 = sbr.rel (0) target = $region29
    $region28: #{tpu_custom_call.1} parent=1 // pred_region
      _
    $region29: #{tpu_custom_call.1} parent=1 // pred_fallthru
      _
    // Predicated region
    $region30: #{tpu_custom_call.1} parent=1 // pred_check
      _
    $region31: #{tpu_custom_call.1} parent=1 // pred_check_branch
      %80 = sbr.rel (0) target = $region33
    $region32: #{tpu_custom_call.1} parent=1 // pred_region
      %s82 = ssub.s32 1024, 1024
      %83 = vsyncadd [#allocation9], %s82
      %s84 = sshll.u32 [#allocation10], 4
      %s85 = int_to_ptr.vmem [resolvable:$true] %s84
      %90 = dma.hbm_to_vmem [thread:$0]  %s7, 1024, %s85, [#allocation9], 256, 256, 16
    $region33: #{tpu_custom_call.1} parent=1 // pred_fallthru
      _
    // Predicated region
    $region34: #{tpu_custom_call.1} parent=1 // pred_check
      _
    $region35: #{tpu_custom_call.1} parent=1 // pred_check_branch
      %92 = sbr.rel (0) target = $region37
    $region36: #{tpu_custom_call.1} parent=1 // pred_region
      _
    $region37: #{tpu_custom_call.1} parent=1 // pred_fallthru
      _
    // Predicated region
    $region38: #{tpu_custom_call.1} parent=1 // pred_check
      _
    $region39: #{tpu_custom_call.1} parent=1 // pred_check_branch
      %94 = sbr.rel (0) target = $region41
    $region40: #{tpu_custom_call.1} parent=1 // pred_region
      %s96 = ssub.s32 4096, 4096
      %97 = vsyncadd [#allocation12], %s96
      %s98 = sshll.u32 [#allocation11], 4
      %s99 = int_to_ptr.vmem [resolvable:$true] %s98
      %104 = dma.hbm_to_vmem [thread:$0]  %s9, 4096, %s99, [#allocation12], 128, 128, 8
    $region41: #{tpu_custom_call.1} parent=1 // pred_fallthru
      _
    // Predicated region
    $region42: #{tpu_custom_call.1} parent=1 // pred_check
      _
    $region43: #{tpu_custom_call.1} parent=1 // pred_check_branch
      %106 = sbr.rel (0) target = $region45
    $region44: #{tpu_custom_call.1} parent=1 // pred_region
      _
    $region45: #{tpu_custom_call.1} parent=1 // pred_fallthru
      _
    // Predicated region
    $region46: #{tpu_custom_call.1} parent=1 // pred_check
      _
    $region47: #{tpu_custom_call.1} parent=1 // pred_check_branch
      %108 = sbr.rel (0) target = $region49
    $region48: #{tpu_custom_call.1} parent=1 // pred_region
      %s110 = ssub.s32 2048, 2048
      %111 = vsyncadd [#allocation12], %s110
      %s112 = sshll.u32 [#allocation13], 4
      %s113 = int_to_ptr.vmem [resolvable:$true] %s112
      %118 = dma.hbm_to_vmem [thread:$0]  %s11, 2048, %s113, [#allocation12], 128, 128, 8
    $region49: #{tpu_custom_call.1} parent=1 // pred_fallthru
      _
    // Predicated region
    $region50: #{tpu_custom_call.1} parent=1 // pred_check
      _
    $region51: #{tpu_custom_call.1} parent=1 // pred_check_branch
      %120 = sbr.rel (0) target = $region53
    $region52: #{tpu_custom_call.1} parent=1 // pred_region
      %s122 = ssub.s32 8192, 8192
      %123 = vsyncadd [#allocation15], %s122
      %s124 = sshll.u32 [#allocation14], 4
      %s125 = int_to_ptr.vmem [resolvable:$true] %s124
      %130 = dma.hbm_to_vmem [thread:$0]  %s12, 8192, %s125, [#allocation15], 256, 256, 16
    $region53: #{tpu_custom_call.1} parent=1 // pred_fallthru
      _
    // Predicated region
    $region54: #{tpu_custom_call.1} parent=1 // pred_check
      _
    $region55: #{tpu_custom_call.1} parent=1 // pred_check_branch
      %132 = sbr.rel (0) target = $region57
    $region56: #{tpu_custom_call.1} parent=1 // pred_region
      %s134 = ssub.s32 2048, 2048
      %135 = vsyncadd [#allocation15], %s134
      %s136 = sshll.u32 [#allocation16], 4
      %s137 = int_to_ptr.vmem [resolvable:$true] %s136
      %142 = dma.hbm_to_vmem [thread:$0]  %s13, 2048, %s137, [#allocation15], 128, 128, 8
    $region57: #{tpu_custom_call.1} parent=1 // pred_fallthru
      _
    // Predicated region
    $region58: #{tpu_custom_call.1} parent=1 // pred_check
      _
    $region59: #{tpu_custom_call.1} parent=1 // pred_check_branch
      %144 = sbr.rel (0) target = $region61
    $region60: #{tpu_custom_call.1} parent=1 // pred_region
      %145 = dma.done [#allocation3], 256
    $region61: #{tpu_custom_call.1} parent=1 // pred_fallthru
      _
    // Predicated region
    $region62: #{tpu_custom_call.1} parent=1 // pred_check
      _
    $region63: #{tpu_custom_call.1} parent=1 // pred_check_branch
      %147 = sbr.rel (0) target = $region65
    $region64: #{tpu_custom_call.1} parent=1 // pred_region
      %148 = dma.done [#allocation6], 1024
    $region65: #{tpu_custom_call.1} parent=1 // pred_fallthru
      _
    // Predicated region
    $region66: #{tpu_custom_call.1} parent=1 // pred_check
      _
    $region67: #{tpu_custom_call.1} parent=1 // pred_check_branch
      %150 = sbr.rel (0) target = $region69
    $region68: #{tpu_custom_call.1} parent=1 // pred_region
      %151 = dma.done [#allocation6], 4096
    $region69: #{tpu_custom_call.1} parent=1 // pred_fallthru
      _
    // Predicated region
    $region70: #{tpu_custom_call.1} parent=1 // pred_check
      _
    $region71: #{tpu_custom_call.1} parent=1 // pred_check_branch
      %153 = sbr.rel (0) target = $region73
    $region72: #{tpu_custom_call.1} parent=1 // pred_region
      %154 = dma.done [#allocation9], 4096
    $region73: #{tpu_custom_call.1} parent=1 // pred_fallthru
      _
    // Predicated region
    $region74: #{tpu_custom_call.1} parent=1 // pred_check
      _
    $region75: #{tpu_custom_call.1} parent=1 // pred_check_branch
      %156 = sbr.rel (0) target = $region77
    $region76: #{tpu_custom_call.1} parent=1 // pred_region
      %157 = dma.done [#allocation9], 1024
    $region77: #{tpu_custom_call.1} parent=1 // pred_fallthru
      _
    // Predicated region
    $region78: #{tpu_custom_call.1} parent=1 // pred_check
      _
    $region79: #{tpu_custom_call.1} parent=1 // pred_check_branch
      %159 = sbr.rel (0) target = $region81
    $region80: #{tpu_custom_call.1} parent=1 // pred_region
      %160 = dma.done [#allocation12], 4096
    $region81: #{tpu_custom_call.1} parent=1 // pred_fallthru
      _
    // Predicated region
    $region82: #{tpu_custom_call.1} parent=1 // pred_check
      _
    $region83: #{tpu_custom_call.1} parent=1 // pred_check_branch
      %162 = sbr.rel (0) target = $region85
    $region84: #{tpu_custom_call.1} parent=1 // pred_region
      %163 = dma.done [#allocation12], 2048
    $region85: #{tpu_custom_call.1} parent=1 // pred_fallthru
      _
    // Predicated region
    $region86: #{tpu_custom_call.1} parent=1 // pred_check
      _
    $region87: #{tpu_custom_call.1} parent=1 // pred_check_branch
      %165 = sbr.rel (0) target = $region89
    $region88: #{tpu_custom_call.1} parent=1 // pred_region
      %166 = dma.done [#allocation15], 8192
    $region89: #{tpu_custom_call.1} parent=1 // pred_fallthru
      _
    // Predicated region
    $region90: #{tpu_custom_call.1} parent=1 // pred_check
      _
    $region91: #{tpu_custom_call.1} parent=1 // pred_check_branch
      %168 = sbr.rel (0) target = $region93
    $region92: #{tpu_custom_call.1} parent=1 // pred_region
      %169 = dma.done [#allocation15], 2048
    $region93: #{tpu_custom_call.1} parent=1 // pred_fallthru
      _
    %v170 = vld [vmem:[#allocation2] sm:$0xff]
    %v171 = vld [vmem:[#allocation2 + $0x8] sm:$0xff]
    %v172 = vld [vmem:[#allocation5] sm:$0xff]
    %v173 = vld [vmem:[#allocation5 + $0x8] sm:$0xff]
    %v174 = vld [vmem:[#allocation5 + $0x10] sm:$0xff]
    %v175 = vld [vmem:[#allocation5 + $0x18] sm:$0xff]
    %v176 = vld [vmem:[#allocation5 + $0x20] sm:$0xff]
    %v177 = vld [vmem:[#allocation5 + $0x28] sm:$0xff]
    %v178 = vld [vmem:[#allocation5 + $0x30] sm:$0xff]
    %v179 = vld [vmem:[#allocation5 + $0x38] sm:$0xff]
    %v180 = vld [vmem:[%s2] sm:$0x3]
    %v182 = vlaneseq
    %v183 = vshrl.u32 %v182, 7
    %v184 = vsub.s32 0, %v183
    %v185 = vrot.slane %v180, %v184
    %v186 = vlaneseq
    %v187 = vshrl.u32 %v186, 7
    %v188 = vsub.s32 1, %v187
    %v189 = vrot.slane %v180, %v188
    %vm192 = vcmask 261120
    %v194 = vsel %vm192, %v170, 0
    %v197 = vsel %vm192, %v171, 0
    %199 = vmatprep.subr.mxu0 0.0
    %200 = vmatpush1.msra.mxu0 0.0
    %201 = vmatprep.subr.mxu0 0.0
    %202 = vmatpush1.msra.mxu0 0.0
    %203 = vmatprep.subr.mxu0 0.0
    %204 = vmatpush1.msra.mxu0 0.0
    %205 = vmatprep.subr.mxu0 0.0
    %206 = vmatpush1.msra.mxu0 0.0
    %207 = vmatprep.subr.mxu0 0.0
    %208 = vmatpush1.msra.mxu0 0.0
    %209 = vmatprep.subr.mxu0 0.0
    %210 = vmatpush1.msra.mxu0 0.0
    %211 = vmatprep.subr.mxu0 0.0
    %212 = vmatpush1.msra.mxu0 0.0
    %213 = vmatprep.subr.mxu0 0.0
    %214 = vmatpush1.msra.mxu0 0.0
    %215 = vmatprep.subr.mxu0 0.0
    %216 = vmatpush1.msra.mxu0 0.0
    %217 = vmatprep.subr.mxu0 0.0
    %218 = vmatpush1.msra.mxu0 0.0
    %219 = vmatprep.subr.mxu0 0.0
    %220 = vmatpush1.msra.mxu0 0.0
    %221 = vmatprep.subr.mxu0 0.0
    %222 = vmatpush1.msra.mxu0 0.0
    %223 = vmatprep.subr.mxu0 %v179
    %224 = vmatpush1.msra.mxu0 %v178
    %225 = vmatprep.subr.mxu0 %v177
    %226 = vmatpush1.msra.mxu0 %v176
    %227 = vmatprep.subr.mxu0 %v175
    %228 = vmatpush1.msra.mxu0 %v174
    %229 = vmatprep.subr.mxu0 %v173
    %230 = vmatpush1.msra.mxu0 %v172
    %231 = vmatprep.subr.mxu0 0.0
    %232 = vmatpush2.msra.mxu0 0.0
    %233 = vmatprep.subr.mxu0 0.0
    %234 = vmatpush2.msra.mxu0 0.0
    %235 = vmatprep.subr.mxu0 0.0
    %236 = vmatpush2.msra.mxu0 0.0
    %237 = vmatprep.subr.mxu0 0.0
    %238 = vmatpush2.msra.mxu0 0.0
    %239 = vmatprep.subr.mxu0 0.0
    %240 = vmatpush2.msra.mxu0 0.0
    %241 = vmatprep.subr.mxu0 0.0
    %242 = vmatpush2.msra.mxu0 0.0
    %243 = vmatprep.subr.mxu0 0.0
    %244 = vmatpush2.msra.mxu0 0.0
    %245 = vmatprep.subr.mxu0 0.0
    %246 = vmatpush2.msra.mxu0 0.0
    %247 = vmatprep.subr.mxu0 0.0
    %248 = vmatpush2.msra.mxu0 0.0
    %249 = vmatprep.subr.mxu0 0.0
    %250 = vmatpush2.msra.mxu0 0.0
    %251 = vmatprep.subr.mxu0 0.0
    %252 = vmatpush2.msra.mxu0 0.0
    %253 = vmatprep.subr.mxu0 0.0
    %254 = vmatpush2.msra.mxu0 0.0
    %255 = vmatprep.subr.mxu0 0.0
    %256 = vmatpush2.msra.mxu0 0.0
    %257 = vmatprep.subr.mxu0 0.0
    %258 = vmatpush2.msra.mxu0 0.0
    %259 = vmatprep.subr.mxu0 0.0
    %260 = vmatpush2.msra.mxu0 0.0
    %261 = vmatprep.subr.mxu0 0.0
    %262 = vmatpush2.msra.mxu0 0.0
    %263 = vmatprep.mubr.f32.mxu0 0.0
    %264 = vmatmul.mubr.f32.gmra.mxu0 %v194
    %v265 = vpop.f32.mrf.mxu0
    %v266 = vadd.f32 %v185, %v265
    %v267 = vpop.f32.mrf.mxu0
    %v268 = vadd.f32 %v189, %v267
    %269 = vmatprep.mubr.f32.mxu0 0.0
    %270 = vmatmul.mubr.f32.gmra.mxu0 %v197
    %v271 = vpop.f32.mrf.mxu0
    %v272 = vadd.f32 %v185, %v271
    %v273 = vpop.f32.mrf.mxu0
    %v274 = vadd.f32 %v189, %v273
    %275 = vdwg.mxu0
    %v276 = vadd.f32 %v266, %v268
    %277 = vadd.xlane.f32.xlu0 %v276
    %v278 = vpop.xlane.xlu0 %277
    %v279 = vadd.f32 %v272, %v274
    %280 = vadd.xlane.f32.xlu0 %v279
    %v281 = vpop.xlane.xlu0 %280
    %v282 = vmul.f32 %v278, 0.00390625
    %v283 = vmul.f32 %v281, 0.00390625
    %v284 = vmul.f32 %v266, %v266
    %v285 = vmul.f32 %v268, %v268
    %v286 = vmul.f32 %v272, %v272
    %v287 = vmul.f32 %v274, %v274
    %v288 = vadd.f32 %v284, %v285
    %289 = vadd.xlane.f32.xlu0 %v288
    %v290 = vpop.xlane.xlu0 %289
    %v291 = vadd.f32 %v286, %v287
    %292 = vadd.xlane.f32.xlu0 %v291
    %v293 = vpop.xlane.xlu0 %292
    %v294 = vmul.f32 %v290, 0.00390625
    %v295 = vmul.f32 %v293, 0.00390625
    %v296 = vmul.f32 %v282, %v282
    %v297 = vmul.f32 %v283, %v283
    %v298 = vsub.f32 %v294, %v296
    %v299 = vsub.f32 %v295, %v297
    %v300 = vmax.f32 %v298, 0.0
    %v301 = vmax.f32 %v299, 0.0
    %v302 = vsub.f32 %v266, %v282
    %v303 = vsub.f32 %v268, %v282
    %v304 = vsub.f32 %v272, %v283
    %v305 = vsub.f32 %v274, %v283
    %v306 = vadd.f32 %v300, 1e-05
    %v307 = vadd.f32 %v301, 1e-05
    %v308 = vrsqrt.pop %v306
    %v309 = vrsqrt.pop %v307
    %v310 = vmul.f32 %v302, %v308
    %v311 = vmul.f32 %v303, %v308
    %v312 = vmul.f32 %v304, %v309
    %v313 = vmul.f32 %v305, %v309
    %v314 = vmul.f32 %v310, 0.5
    %v315 = vmul.f32 %v311, 0.5
    %v316 = vmul.f32 %v312, 0.5
    %v317 = vmul.f32 %v313, 0.5
    %v318 = vmul.f32 %v310, 0.044715
    %v319 = vmul.f32 %v311, 0.044715
    %v320 = vmul.f32 %v312, 0.044715
    %v321 = vmul.f32 %v313, 0.044715
    %v322 = vmul.f32 %v318, %v310
    %v323 = vmul.f32 %v319, %v311
    %v324 = vmul.f32 %v320, %v312
    %v325 = vmul.f32 %v321, %v313
    %v326 = vmul.f32 %v322, %v310
    %v327 = vmul.f32 %v323, %v311
    %v328 = vmul.f32 %v324, %v312
    %v329 = vmul.f32 %v325, %v313
    %v330 = vadd.f32 %v310, %v326
    %v331 = vadd.f32 %v311, %v327
    %v332 = vadd.f32 %v312, %v328
    %v333 = vadd.f32 %v313, %v329
    %v334 = vmul.f32 %v330, 0.7978845
    %v335 = vmul.f32 %v331, 0.7978845
    %v336 = vmul.f32 %v332, 0.7978845
    %v337 = vmul.f32 %v333, 0.7978845
    %v338 = vtanh.pop %v334
    %v339 = vtanh.pop %v335
    %v340 = vtanh.pop %v336
    %v341 = vtanh.pop %v337
    %v342 = vadd.f32 %v338, 1.0
    %v343 = vadd.f32 %v339, 1.0
    %v344 = vadd.f32 %v340, 1.0
    %v345 = vadd.f32 %v341, 1.0
    %v346 = vmul.f32 %v314, %v342
    %v347 = vmul.f32 %v315, %v343
    %v348 = vmul.f32 %v316, %v344
    %v349 = vmul.f32 %v317, %v345
    %v350 = vld [vmem:[#allocation7] sm:$0xff]
    %v351 = vld [vmem:[#allocation7 + $0x8] sm:$0xff]
    %v352 = vld [vmem:[#allocation7 + $0x10] sm:$0xff]
    %v353 = vld [vmem:[#allocation7 + $0x18] sm:$0xff]
    %v354 = vld [vmem:[#allocation7 + $0x20] sm:$0xff]
    %v355 = vld [vmem:[#allocation7 + $0x28] sm:$0xff]
    %v356 = vld [vmem:[#allocation7 + $0x30] sm:$0xff]
    %v357 = vld [vmem:[#allocation7 + $0x38] sm:$0xff]
    %v358 = vld [vmem:[#allocation7 + $0x40] sm:$0xff]
    %v359 = vld [vmem:[#allocation7 + $0x48] sm:$0xff]
    %v360 = vld [vmem:[#allocation7 + $0x50] sm:$0xff]
    %v361 = vld [vmem:[#allocation7 + $0x58] sm:$0xff]
    %v362 = vld [vmem:[#allocation7 + $0x60] sm:$0xff]
    %v363 = vld [vmem:[#allocation7 + $0x68] sm:$0xff]
    %v364 = vld [vmem:[#allocation7 + $0x70] sm:$0xff]
    %v365 = vld [vmem:[#allocation7 + $0x78] sm:$0xff]
    %v366 = vld [vmem:[#allocation7 + $0x80] sm:$0xff]
    %v367 = vld [vmem:[#allocation7 + $0x88] sm:$0xff]
    %v368 = vld [vmem:[#allocation7 + $0x90] sm:$0xff]
    %v369 = vld [vmem:[#allocation7 + $0x98] sm:$0xff]
    %v370 = vld [vmem:[#allocation7 + $0xa0] sm:$0xff]
    %v371 = vld [vmem:[#allocation7 + $0xa8] sm:$0xff]
    %v372 = vld [vmem:[#allocation7 + $0xb0] sm:$0xff]
    %v373 = vld [vmem:[#allocation7 + $0xb8] sm:$0xff]
    %v374 = vld [vmem:[#allocation7 + $0xc0] sm:$0xff]
    %v375 = vld [vmem:[#allocation7 + $0xc8] sm:$0xff]
    %v376 = vld [vmem:[#allocation7 + $0xd0] sm:$0xff]
    %v377 = vld [vmem:[#allocation7 + $0xd8] sm:$0xff]
    %v378 = vld [vmem:[#allocation7 + $0xe0] sm:$0xff]
    %v379 = vld [vmem:[#allocation7 + $0xe8] sm:$0xff]
    %v380 = vld [vmem:[#allocation7 + $0xf0] sm:$0xff]
    %v381 = vld [vmem:[#allocation7 + $0xf8] sm:$0xff]
    %v382 = vld [vmem:[%s4] sm:$0x1]
    %v384 = vlaneseq
    %v385 = vshrl.u32 %v384, 7
    %v386 = vsub.s32 0, %v385
    %v387 = vrot.slane %v382, %v386
    %389 = vmatprep.subr.mxu0 0.0
    %390 = vmatpush1.msra.mxu0 %v365
    %391 = vmatprep.subr.mxu0 0.0
    %392 = vmatpush1.msra.mxu0 %v364
    %393 = vmatprep.subr.mxu0 0.0
    %394 = vmatpush1.msra.mxu0 %v363
    %395 = vmatprep.subr.mxu0 0.0
    %396 = vmatpush1.msra.mxu0 %v362
    %397 = vmatprep.subr.mxu0 0.0
    %398 = vmatpush1.msra.mxu0 %v361
    %399 = vmatprep.subr.mxu0 0.0
    %400 = vmatpush1.msra.mxu0 %v360
    %401 = vmatprep.subr.mxu0 0.0
    %402 = vmatpush1.msra.mxu0 %v359
    %403 = vmatprep.subr.mxu0 0.0
    %404 = vmatpush1.msra.mxu0 %v358
    %405 = vmatprep.subr.mxu0 0.0
    %406 = vmatpush1.msra.mxu0 %v357
    %407 = vmatprep.subr.mxu0 0.0
    %408 = vmatpush1.msra.mxu0 %v356
    %409 = vmatprep.subr.mxu0 0.0
    %410 = vmatpush1.msra.mxu0 %v355
    %411 = vmatprep.subr.mxu0 0.0
    %412 = vmatpush1.msra.mxu0 %v354
    %413 = vmatprep.subr.mxu0 0.0
    %414 = vmatpush1.msra.mxu0 %v353
    %415 = vmatprep.subr.mxu0 0.0
    %416 = vmatpush1.msra.mxu0 %v352
    %417 = vmatprep.subr.mxu0 0.0
    %418 = vmatpush1.msra.mxu0 %v351
    %419 = vmatprep.subr.mxu0 0.0
    %420 = vmatpush1.msra.mxu0 %v350
    %421 = vmatprep.subr.mxu0 0.0
    %422 = vmatpush2.msra.mxu0 %v381
    %423 = vmatprep.subr.mxu0 0.0
    %424 = vmatpush2.msra.mxu0 %v380
    %425 = vmatprep.subr.mxu0 0.0
    %426 = vmatpush2.msra.mxu0 %v379
    %427 = vmatprep.subr.mxu0 0.0
    %428 = vmatpush2.msra.mxu0 %v378
    %429 = vmatprep.subr.mxu0 0.0
    %430 = vmatpush2.msra.mxu0 %v377
    %431 = vmatprep.subr.mxu0 0.0
    %432 = vmatpush2.msra.mxu0 %v376
    %433 = vmatprep.subr.mxu0 0.0
    %434 = vmatpush2.msra.mxu0 %v375
    %435 = vmatprep.subr.mxu0 0.0
    %436 = vmatpush2.msra.mxu0 %v374
    %437 = vmatprep.subr.mxu0 0.0
    %438 = vmatpush2.msra.mxu0 %v373
    %439 = vmatprep.subr.mxu0 0.0
    %440 = vmatpush2.msra.mxu0 %v372
    %441 = vmatprep.subr.mxu0 0.0
    %442 = vmatpush2.msra.mxu0 %v371
    %443 = vmatprep.subr.mxu0 0.0
    %444 = vmatpush2.msra.mxu0 %v370
    %445 = vmatprep.subr.mxu0 0.0
    %446 = vmatpush2.msra.mxu0 %v369
    %447 = vmatprep.subr.mxu0 0.0
    %448 = vmatpush2.msra.mxu0 %v368
    %449 = vmatprep.subr.mxu0 0.0
    %450 = vmatpush2.msra.mxu0 %v367
    %451 = vmatprep.subr.mxu0 0.0
    %452 = vmatpush2.msra.mxu0 %v366
    %453 = vmatprep.mubr.f32.mxu0 %v347
    %454 = vmatmul.mubr.f32.gmra.mxu0 %v346
    %v455 = vpop.f32.mrf.mxu0
    %v456 = vadd.f32 %v387, %v455
    %v457 = vpop.f32.mrf.mxu0
    %458 = vmatprep.mubr.f32.mxu0 %v349
    %459 = vmatmul.mubr.f32.gmra.mxu0 %v348
    %v460 = vpop.f32.mrf.mxu0
    %v461 = vadd.f32 %v387, %v460
    %v462 = vpop.f32.mrf.mxu0
    %463 = vdwg.mxu0
    %v464 = vld [vmem:[#allocation8] sm:$0xff]
    %v465 = vld [vmem:[#allocation8 + $0x8] sm:$0xff]
    %v466 = vld [vmem:[#allocation8 + $0x10] sm:$0xff]
    %v467 = vld [vmem:[#allocation8 + $0x18] sm:$0xff]
    %v468 = vld [vmem:[#allocation8 + $0x20] sm:$0xff]
    %v469 = vld [vmem:[#allocation8 + $0x28] sm:$0xff]
    %v470 = vld [vmem:[#allocation8 + $0x30] sm:$0xff]
    %v471 = vld [vmem:[#allocation8 + $0x38] sm:$0xff]
    %v472 = vld [vmem:[#allocation8 + $0x40] sm:$0xff]
    %v473 = vld [vmem:[#allocation8 + $0x48] sm:$0xff]
    %v474 = vld [vmem:[#allocation8 + $0x50] sm:$0xff]
    %v475 = vld [vmem:[#allocation8 + $0x58] sm:$0xff]
    %v476 = vld [vmem:[#allocation8 + $0x60] sm:$0xff]
    %v477 = vld [vmem:[#allocation8 + $0x68] sm:$0xff]
    %v478 = vld [vmem:[#allocation8 + $0x70] sm:$0xff]
    %v479 = vld [vmem:[#allocation8 + $0x78] sm:$0xff]
    %v480 = vld [vmem:[#allocation8 + $0x80] sm:$0xff]
    %v481 = vld [vmem:[#allocation8 + $0x88] sm:$0xff]
    %v482 = vld [vmem:[#allocation8 + $0x90] sm:$0xff]
    %v483 = vld [vmem:[#allocation8 + $0x98] sm:$0xff]
    %v484 = vld [vmem:[#allocation8 + $0xa0] sm:$0xff]
    %v485 = vld [vmem:[#allocation8 + $0xa8] sm:$0xff]
    %v486 = vld [vmem:[#allocation8 + $0xb0] sm:$0xff]
    %v487 = vld [vmem:[#allocation8 + $0xb8] sm:$0xff]
    %v488 = vld [vmem:[#allocation8 + $0xc0] sm:$0xff]
    %v489 = vld [vmem:[#allocation8 + $0xc8] sm:$0xff]
    %v490 = vld [vmem:[#allocation8 + $0xd0] sm:$0xff]
    %v491 = vld [vmem:[#allocation8 + $0xd8] sm:$0xff]
    %v492 = vld [vmem:[#allocation8 + $0xe0] sm:$0xff]
    %v493 = vld [vmem:[#allocation8 + $0xe8] sm:$0xff]
    %v494 = vld [vmem:[#allocation8 + $0xf0] sm:$0xff]
    %v495 = vld [vmem:[#allocation8 + $0xf8] sm:$0xff]
    %v496 = vld [vmem:[%s6] sm:$0x1]
    %v498 = vlaneseq
    %v499 = vshrl.u32 %v498, 7
    %v500 = vsub.s32 0, %v499
    %v501 = vrot.slane %v496, %v500
    %503 = vmatprep.subr.mxu0 0.0
    %504 = vmatpush1.msra.mxu0 %v479
    %505 = vmatprep.subr.mxu0 0.0
    %506 = vmatpush1.msra.mxu0 %v478
    %507 = vmatprep.subr.mxu0 0.0
    %508 = vmatpush1.msra.mxu0 %v477
    %509 = vmatprep.subr.mxu0 0.0
    %510 = vmatpush1.msra.mxu0 %v476
    %511 = vmatprep.subr.mxu0 0.0
    %512 = vmatpush1.msra.mxu0 %v475
    %513 = vmatprep.subr.mxu0 0.0
    %514 = vmatpush1.msra.mxu0 %v474
    %515 = vmatprep.subr.mxu0 0.0
    %516 = vmatpush1.msra.mxu0 %v473
    %517 = vmatprep.subr.mxu0 0.0
    %518 = vmatpush1.msra.mxu0 %v472
    %519 = vmatprep.subr.mxu0 0.0
    %520 = vmatpush1.msra.mxu0 %v471
    %521 = vmatprep.subr.mxu0 0.0
    %522 = vmatpush1.msra.mxu0 %v470
    %523 = vmatprep.subr.mxu0 0.0
    %524 = vmatpush1.msra.mxu0 %v469
    %525 = vmatprep.subr.mxu0 0.0
    %526 = vmatpush1.msra.mxu0 %v468
    %527 = vmatprep.subr.mxu0 0.0
    %528 = vmatpush1.msra.mxu0 %v467
    %529 = vmatprep.subr.mxu0 0.0
    %530 = vmatpush1.msra.mxu0 %v466
    %531 = vmatprep.subr.mxu0 0.0
    %532 = vmatpush1.msra.mxu0 %v465
    %533 = vmatprep.subr.mxu0 0.0
    %534 = vmatpush1.msra.mxu0 %v464
    %535 = vmatprep.subr.mxu0 0.0
    %536 = vmatpush2.msra.mxu0 %v495
    %537 = vmatprep.subr.mxu0 0.0
    %538 = vmatpush2.msra.mxu0 %v494
    %539 = vmatprep.subr.mxu0 0.0
    %540 = vmatpush2.msra.mxu0 %v493
    %541 = vmatprep.subr.mxu0 0.0
    %542 = vmatpush2.msra.mxu0 %v492
    %543 = vmatprep.subr.mxu0 0.0
    %544 = vmatpush2.msra.mxu0 %v491
    %545 = vmatprep.subr.mxu0 0.0
    %546 = vmatpush2.msra.mxu0 %v490
    %547 = vmatprep.subr.mxu0 0.0
    %548 = vmatpush2.msra.mxu0 %v489
    %549 = vmatprep.subr.mxu0 0.0
    %550 = vmatpush2.msra.mxu0 %v488
    %551 = vmatprep.subr.mxu0 0.0
    %552 = vmatpush2.msra.mxu0 %v487
    %553 = vmatprep.subr.mxu0 0.0
    %554 = vmatpush2.msra.mxu0 %v486
    %555 = vmatprep.subr.mxu0 0.0
    %556 = vmatpush2.msra.mxu0 %v485
    %557 = vmatprep.subr.mxu0 0.0
    %558 = vmatpush2.msra.mxu0 %v484
    %559 = vmatprep.subr.mxu0 0.0
    %560 = vmatpush2.msra.mxu0 %v483
    %561 = vmatprep.subr.mxu0 0.0
    %562 = vmatpush2.msra.mxu0 %v482
    %563 = vmatprep.subr.mxu0 0.0
    %564 = vmatpush2.msra.mxu0 %v481
    %565 = vmatprep.subr.mxu0 0.0
    %566 = vmatpush2.msra.mxu0 %v480
    %567 = vmatprep.mubr.f32.mxu0 %v347
    %568 = vmatmul.mubr.f32.gmra.mxu0 %v346
    %v569 = vpop.f32.mrf.mxu0
    %v570 = vadd.f32 %v501, %v569
    %v571 = vpop.f32.mrf.mxu0
    %572 = vmatprep.mubr.f32.mxu0 %v349
    %573 = vmatmul.mubr.f32.gmra.mxu0 %v348
    %v574 = vpop.f32.mrf.mxu0
    %v575 = vadd.f32 %v501, %v574
    %v576 = vpop.f32.mrf.mxu0
    %577 = vdwg.mxu0
    %v578 = vld [vmem:[#allocation10] sm:$0xff]
    %v579 = vld [vmem:[#allocation10 + $0x8] sm:$0xff]
    %v580 = vld [vmem:[#allocation10 + $0x10] sm:$0xff]
    %v581 = vld [vmem:[#allocation10 + $0x18] sm:$0xff]
    %v582 = vld [vmem:[#allocation10 + $0x20] sm:$0xff]
    %v583 = vld [vmem:[#allocation10 + $0x28] sm:$0xff]
    %v584 = vld [vmem:[#allocation10 + $0x30] sm:$0xff]
    %v585 = vld [vmem:[#allocation10 + $0x38] sm:$0xff]
    %v586 = vld [vmem:[%s8] sm:$0x3]
    %v588 = vlaneseq
    %v589 = vshrl.u32 %v588, 7
    %v590 = vsub.s32 0, %v589
    %v591 = vrot.slane %v586, %v590
    %v592 = vlaneseq
    %v593 = vshrl.u32 %v592, 7
    %v594 = vsub.s32 1, %v593
    %v595 = vrot.slane %v586, %v594
    %598 = vmatprep.subr.mxu0 0.0
    %599 = vmatpush1.msra.mxu0 0.0
    %600 = vmatprep.subr.mxu0 0.0
    %601 = vmatpush1.msra.mxu0 0.0
    %602 = vmatprep.subr.mxu0 0.0
    %603 = vmatpush1.msra.mxu0 0.0
    %604 = vmatprep.subr.mxu0 0.0
    %605 = vmatpush1.msra.mxu0 0.0
    %606 = vmatprep.subr.mxu0 0.0
    %607 = vmatpush1.msra.mxu0 0.0
    %608 = vmatprep.subr.mxu0 0.0
    %609 = vmatpush1.msra.mxu0 0.0
    %610 = vmatprep.subr.mxu0 0.0
    %611 = vmatpush1.msra.mxu0 0.0
    %612 = vmatprep.subr.mxu0 0.0
    %613 = vmatpush1.msra.mxu0 0.0
    %614 = vmatprep.subr.mxu0 0.0
    %615 = vmatpush1.msra.mxu0 0.0
    %616 = vmatprep.subr.mxu0 0.0
    %617 = vmatpush1.msra.mxu0 0.0
    %618 = vmatprep.subr.mxu0 0.0
    %619 = vmatpush1.msra.mxu0 0.0
    %620 = vmatprep.subr.mxu0 0.0
    %621 = vmatpush1.msra.mxu0 0.0
    %622 = vmatprep.subr.mxu0 %v585
    %623 = vmatpush1.msra.mxu0 %v584
    %624 = vmatprep.subr.mxu0 %v583
    %625 = vmatpush1.msra.mxu0 %v582
    %626 = vmatprep.subr.mxu0 %v581
    %627 = vmatpush1.msra.mxu0 %v580
    %628 = vmatprep.subr.mxu0 %v579
    %629 = vmatpush1.msra.mxu0 %v578
    %630 = vmatprep.subr.mxu0 0.0
    %631 = vmatpush2.msra.mxu0 0.0
    %632 = vmatprep.subr.mxu0 0.0
    %633 = vmatpush2.msra.mxu0 0.0
    %634 = vmatprep.subr.mxu0 0.0
    %635 = vmatpush2.msra.mxu0 0.0
    %636 = vmatprep.subr.mxu0 0.0
    %637 = vmatpush2.msra.mxu0 0.0
    %638 = vmatprep.subr.mxu0 0.0
    %639 = vmatpush2.msra.mxu0 0.0
    %640 = vmatprep.subr.mxu0 0.0
    %641 = vmatpush2.msra.mxu0 0.0
    %642 = vmatprep.subr.mxu0 0.0
    %643 = vmatpush2.msra.mxu0 0.0
    %644 = vmatprep.subr.mxu0 0.0
    %645 = vmatpush2.msra.mxu0 0.0
    %646 = vmatprep.subr.mxu0 0.0
    %647 = vmatpush2.msra.mxu0 0.0
    %648 = vmatprep.subr.mxu0 0.0
    %649 = vmatpush2.msra.mxu0 0.0
    %650 = vmatprep.subr.mxu0 0.0
    %651 = vmatpush2.msra.mxu0 0.0
    %652 = vmatprep.subr.mxu0 0.0
    %653 = vmatpush2.msra.mxu0 0.0
    %654 = vmatprep.subr.mxu0 0.0
    %655 = vmatpush2.msra.mxu0 0.0
    %656 = vmatprep.subr.mxu0 0.0
    %657 = vmatpush2.msra.mxu0 0.0
    %658 = vmatprep.subr.mxu0 0.0
    %659 = vmatpush2.msra.mxu0 0.0
    %660 = vmatprep.subr.mxu0 0.0
    %661 = vmatpush2.msra.mxu0 0.0
    %662 = vmatprep.mubr.f32.mxu0 0.0
    %663 = vmatmul.mubr.f32.gmra.mxu0 %v194
    %v664 = vpop.f32.mrf.mxu0
    %v665 = vadd.f32 %v591, %v664
    %v666 = vpop.f32.mrf.mxu0
    %v667 = vadd.f32 %v595, %v666
    %668 = vmatprep.mubr.f32.mxu0 0.0
    %669 = vmatmul.mubr.f32.gmra.mxu0 %v197
    %v670 = vpop.f32.mrf.mxu0
    %v671 = vadd.f32 %v591, %v670
    %v672 = vpop.f32.mrf.mxu0
    %v673 = vadd.f32 %v595, %v672
    %674 = vdwg.mxu0
    %v675 = vld [vmem:[#allocation14] sm:$0xff]
    %v676 = vld [vmem:[#allocation14 + $0x8] sm:$0xff]
    %v677 = vld [vmem:[#allocation14 + $0x10] sm:$0xff]
    %v678 = vld [vmem:[#allocation14 + $0x18] sm:$0xff]
    %v679 = vld [vmem:[#allocation14 + $0x20] sm:$0xff]
    %v680 = vld [vmem:[#allocation14 + $0x28] sm:$0xff]
    %v681 = vld [vmem:[#allocation14 + $0x30] sm:$0xff]
    %v682 = vld [vmem:[#allocation14 + $0x38] sm:$0xff]
    %v683 = vld [vmem:[#allocation14 + $0x40] sm:$0xff]
    %v684 = vld [vmem:[#allocation14 + $0x48] sm:$0xff]
    %v685 = vld [vmem:[#allocation14 + $0x50] sm:$0xff]
    %v686 = vld [vmem:[#allocation14 + $0x58] sm:$0xff]
    %v687 = vld [vmem:[#allocation14 + $0x60] sm:$0xff]
    %v688 = vld [vmem:[#allocation14 + $0x68] sm:$0xff]
    %v689 = vld [vmem:[#allocation14 + $0x70] sm:$0xff]
    %v690 = vld [vmem:[#allocation14 + $0x78] sm:$0xff]
    %v691 = vld [vmem:[#allocation14 + $0x80] sm:$0xff]
    %v692 = vld [vmem:[#allocation14 + $0x88] sm:$0xff]
    %v693 = vld [vmem:[#allocation14 + $0x90] sm:$0xff]
    %v694 = vld [vmem:[#allocation14 + $0x98] sm:$0xff]
    %v695 = vld [vmem:[#allocation14 + $0xa0] sm:$0xff]
    %v696 = vld [vmem:[#allocation14 + $0xa8] sm:$0xff]
    %v697 = vld [vmem:[#allocation14 + $0xb0] sm:$0xff]
    %v698 = vld [vmem:[#allocation14 + $0xb8] sm:$0xff]
    %v699 = vld [vmem:[#allocation14 + $0xc0] sm:$0xff]
    %v700 = vld [vmem:[#allocation14 + $0xc8] sm:$0xff]
    %v701 = vld [vmem:[#allocation14 + $0xd0] sm:$0xff]
    %v702 = vld [vmem:[#allocation14 + $0xd8] sm:$0xff]
    %v703 = vld [vmem:[#allocation14 + $0xe0] sm:$0xff]
    %v704 = vld [vmem:[#allocation14 + $0xe8] sm:$0xff]
    %v705 = vld [vmem:[#allocation14 + $0xf0] sm:$0xff]
    %v706 = vld [vmem:[#allocation14 + $0xf8] sm:$0xff]
    %v707 = vld [vmem:[#allocation14 + $0x100] sm:$0xff]
    %v708 = vld [vmem:[#allocation14 + $0x108] sm:$0xff]
    %v709 = vld [vmem:[#allocation14 + $0x110] sm:$0xff]
    %v710 = vld [vmem:[#allocation14 + $0x118] sm:$0xff]
    %v711 = vld [vmem:[#allocation14 + $0x120] sm:$0xff]
    %v712 = vld [vmem:[#allocation14 + $0x128] sm:$0xff]
    %v713 = vld [vmem:[#allocation14 + $0x130] sm:$0xff]
    %v714 = vld [vmem:[#allocation14 + $0x138] sm:$0xff]
    %v715 = vld [vmem:[#allocation14 + $0x140] sm:$0xff]
    %v716 = vld [vmem:[#allocation14 + $0x148] sm:$0xff]
    %v717 = vld [vmem:[#allocation14 + $0x150] sm:$0xff]
    %v718 = vld [vmem:[#allocation14 + $0x158] sm:$0xff]
    %v719 = vld [vmem:[#allocation14 + $0x160] sm:$0xff]
    %v720 = vld [vmem:[#allocation14 + $0x168] sm:$0xff]
    %v721 = vld [vmem:[#allocation14 + $0x170] sm:$0xff]
    %v722 = vld [vmem:[#allocation14 + $0x178] sm:$0xff]
    %v723 = vld [vmem:[#allocation14 + $0x180] sm:$0xff]
    %v724 = vld [vmem:[#allocation14 + $0x188] sm:$0xff]
    %v725 = vld [vmem:[#allocation14 + $0x190] sm:$0xff]
    %v726 = vld [vmem:[#allocation14 + $0x198] sm:$0xff]
    %v727 = vld [vmem:[#allocation14 + $0x1a0] sm:$0xff]
    %v728 = vld [vmem:[#allocation14 + $0x1a8] sm:$0xff]
    %v729 = vld [vmem:[#allocation14 + $0x1b0] sm:$0xff]
    %v730 = vld [vmem:[#allocation14 + $0x1b8] sm:$0xff]
    %v731 = vld [vmem:[#allocation14 + $0x1c0] sm:$0xff]
    %v732 = vld [vmem:[#allocation14 + $0x1c8] sm:$0xff]
    %v733 = vld [vmem:[#allocation14 + $0x1d0] sm:$0xff]
    %v734 = vld [vmem:[#allocation14 + $0x1d8] sm:$0xff]
    %v735 = vld [vmem:[#allocation14 + $0x1e0] sm:$0xff]
    %v736 = vld [vmem:[#allocation14 + $0x1e8] sm:$0xff]
    %v737 = vld [vmem:[#allocation14 + $0x1f0] sm:$0xff]
    %v738 = vld [vmem:[#allocation14 + $0x1f8] sm:$0xff]
    %739 = vmatprep.subr.mxu0 %v706
    %740 = vmatpush1.msra.mxu0 %v705
    %741 = vmatprep.subr.mxu0 %v704
    %742 = vmatpush1.msra.mxu0 %v703
    %743 = vmatprep.subr.mxu0 %v702
    %744 = vmatpush1.msra.mxu0 %v701
    %745 = vmatprep.subr.mxu0 %v700
    %746 = vmatpush1.msra.mxu0 %v699
    %747 = vmatprep.subr.mxu0 %v698
    %748 = vmatpush1.msra.mxu0 %v697
    %749 = vmatprep.subr.mxu0 %v696
    %750 = vmatpush1.msra.mxu0 %v695
    %751 = vmatprep.subr.mxu0 %v694
    %752 = vmatpush1.msra.mxu0 %v693
    %753 = vmatprep.subr.mxu0 %v692
    %754 = vmatpush1.msra.mxu0 %v691
    %755 = vmatprep.subr.mxu0 %v690
    %756 = vmatpush1.msra.mxu0 %v689
    %757 = vmatprep.subr.mxu0 %v688
    %758 = vmatpush1.msra.mxu0 %v687
    %759 = vmatprep.subr.mxu0 %v686
    %760 = vmatpush1.msra.mxu0 %v685
    %761 = vmatprep.subr.mxu0 %v684
    %762 = vmatpush1.msra.mxu0 %v683
    %763 = vmatprep.subr.mxu0 %v682
    %764 = vmatpush1.msra.mxu0 %v681
    %765 = vmatprep.subr.mxu0 %v680
    %766 = vmatpush1.msra.mxu0 %v679
    %767 = vmatprep.subr.mxu0 %v678
    %768 = vmatpush1.msra.mxu0 %v677
    %769 = vmatprep.subr.mxu0 %v676
    %770 = vmatpush1.msra.mxu0 %v675
    %771 = vmatprep.subr.mxu0 %v738
    %772 = vmatpush2.msra.mxu0 %v737
    %773 = vmatprep.subr.mxu0 %v736
    %774 = vmatpush2.msra.mxu0 %v735
    %775 = vmatprep.subr.mxu0 %v734
    %776 = vmatpush2.msra.mxu0 %v733
    %777 = vmatprep.subr.mxu0 %v732
    %778 = vmatpush2.msra.mxu0 %v731
    %779 = vmatprep.subr.mxu0 %v730
    %780 = vmatpush2.msra.mxu0 %v729
    %781 = vmatprep.subr.mxu0 %v728
    %782 = vmatpush2.msra.mxu0 %v727
    %783 = vmatprep.subr.mxu0 %v726
    %784 = vmatpush2.msra.mxu0 %v725
    %785 = vmatprep.subr.mxu0 %v724
    %786 = vmatpush2.msra.mxu0 %v723
    %787 = vmatprep.subr.mxu0 %v722
    %788 = vmatpush2.msra.mxu0 %v721
    %789 = vmatprep.subr.mxu0 %v720
    %790 = vmatpush2.msra.mxu0 %v719
    %791 = vmatprep.subr.mxu0 %v718
    %792 = vmatpush2.msra.mxu0 %v717
    %793 = vmatprep.subr.mxu0 %v716
    %794 = vmatpush2.msra.mxu0 %v715
    %795 = vmatprep.subr.mxu0 %v714
    %796 = vmatpush2.msra.mxu0 %v713
    %797 = vmatprep.subr.mxu0 %v712
    %798 = vmatpush2.msra.mxu0 %v711
    %799 = vmatprep.subr.mxu0 %v710
    %800 = vmatpush2.msra.mxu0 %v709
    %801 = vmatprep.subr.mxu0 %v708
    %802 = vmatpush2.msra.mxu0 %v707
    %803 = vmatprep.mubr.f32.mxu0 %v667
    %804 = vmatmul.mubr.f32.gmra.mxu0 %v665
    %v805 = vpop.f32.mrf.mxu0
    %v806 = vadd.f32 0.0, %v805
    %v807 = vpop.f32.mrf.mxu0
    %v808 = vadd.f32 0.0, %v807
    %809 = vmatprep.mubr.f32.mxu0 %v673
    %810 = vmatmul.mubr.f32.gmra.mxu0 %v671
    %v811 = vpop.f32.mrf.mxu0
    %v812 = vadd.f32 0.0, %v811
    %v813 = vpop.f32.mrf.mxu0
    %v814 = vadd.f32 0.0, %v813
    %815 = vdwg.mxu0
    %v816 = vmul.f32 %v665, %v665
    %v817 = vmul.f32 %v667, %v667
    %v818 = vmul.f32 %v671, %v671
    %v819 = vmul.f32 %v673, %v673
    %820 = vmatprep.subr.mxu0 %v706
    %821 = vmatpush1.msra.mxu0 %v705
    %822 = vmatprep.subr.mxu0 %v704
    %823 = vmatpush1.msra.mxu0 %v703
    %824 = vmatprep.subr.mxu0 %v702
    %825 = vmatpush1.msra.mxu0 %v701
    %826 = vmatprep.subr.mxu0 %v700
    %827 = vmatpush1.msra.mxu0 %v699
    %828 = vmatprep.subr.mxu0 %v698
    %829 = vmatpush1.msra.mxu0 %v697
    %830 = vmatprep.subr.mxu0 %v696
    %831 = vmatpush1.msra.mxu0 %v695
    %832 = vmatprep.subr.mxu0 %v694
    %833 = vmatpush1.msra.mxu0 %v693
    %834 = vmatprep.subr.mxu0 %v692
    %835 = vmatpush1.msra.mxu0 %v691
    %836 = vmatprep.subr.mxu0 %v690
    %837 = vmatpush1.msra.mxu0 %v689
    %838 = vmatprep.subr.mxu0 %v688
    %839 = vmatpush1.msra.mxu0 %v687
    %840 = vmatprep.subr.mxu0 %v686
    %841 = vmatpush1.msra.mxu0 %v685
    %842 = vmatprep.subr.mxu0 %v684
    %843 = vmatpush1.msra.mxu0 %v683
    %844 = vmatprep.subr.mxu0 %v682
    %845 = vmatpush1.msra.mxu0 %v681
    %846 = vmatprep.subr.mxu0 %v680
    %847 = vmatpush1.msra.mxu0 %v679
    %848 = vmatprep.subr.mxu0 %v678
    %849 = vmatpush1.msra.mxu0 %v677
    %850 = vmatprep.subr.mxu0 %v676
    %851 = vmatpush1.msra.mxu0 %v675
    %852 = vmatprep.subr.mxu0 %v738
    %853 = vmatpush2.msra.mxu0 %v737
    %854 = vmatprep.subr.mxu0 %v736
    %855 = vmatpush2.msra.mxu0 %v735
    %856 = vmatprep.subr.mxu0 %v734
    %857 = vmatpush2.msra.mxu0 %v733
    %858 = vmatprep.subr.mxu0 %v732
    %859 = vmatpush2.msra.mxu0 %v731
    %860 = vmatprep.subr.mxu0 %v730
    %861 = vmatpush2.msra.mxu0 %v729
    %862 = vmatprep.subr.mxu0 %v728
    %863 = vmatpush2.msra.mxu0 %v727
    %864 = vmatprep.subr.mxu0 %v726
    %865 = vmatpush2.msra.mxu0 %v725
    %866 = vmatprep.subr.mxu0 %v724
    %867 = vmatpush2.msra.mxu0 %v723
    %868 = vmatprep.subr.mxu0 %v722
    %869 = vmatpush2.msra.mxu0 %v721
    %870 = vmatprep.subr.mxu0 %v720
    %871 = vmatpush2.msra.mxu0 %v719
    %872 = vmatprep.subr.mxu0 %v718
    %873 = vmatpush2.msra.mxu0 %v717
    %874 = vmatprep.subr.mxu0 %v716
    %875 = vmatpush2.msra.mxu0 %v715
    %876 = vmatprep.subr.mxu0 %v714
    %877 = vmatpush2.msra.mxu0 %v713
    %878 = vmatprep.subr.mxu0 %v712
    %879 = vmatpush2.msra.mxu0 %v711
    %880 = vmatprep.subr.mxu0 %v710
    %881 = vmatpush2.msra.mxu0 %v709
    %882 = vmatprep.subr.mxu0 %v708
    %883 = vmatpush2.msra.mxu0 %v707
    %884 = vmatprep.mubr.f32.mxu0 %v817
    %885 = vmatmul.mubr.f32.gmra.mxu0 %v816
    %v886 = vpop.f32.mrf.mxu0
    %v887 = vadd.f32 0.0, %v886
    %v888 = vpop.f32.mrf.mxu0
    %v889 = vadd.f32 0.0, %v888
    %890 = vmatprep.mubr.f32.mxu0 %v819
    %891 = vmatmul.mubr.f32.gmra.mxu0 %v818
    %v892 = vpop.f32.mrf.mxu0
    %v893 = vadd.f32 0.0, %v892
    %v894 = vpop.f32.mrf.mxu0
    %v895 = vadd.f32 0.0, %v894
    %896 = vdwg.mxu0
    %v897 = vmul.f32 %v806, %v806
    %v898 = vmul.f32 %v808, %v808
    %v899 = vmul.f32 %v812, %v812
    %v900 = vmul.f32 %v814, %v814
    %v901 = vsub.f32 %v887, %v897
    %v902 = vsub.f32 %v889, %v898
    %v903 = vsub.f32 %v893, %v899
    %v904 = vsub.f32 %v895, %v900
    %v905 = vmax.f32 %v901, 0.0
    %v906 = vmax.f32 %v902, 0.0
    %v907 = vmax.f32 %v903, 0.0
    %v908 = vmax.f32 %v904, 0.0
    %v909 = vsub.f32 %v665, %v806
    %v910 = vsub.f32 %v667, %v808
    %v911 = vsub.f32 %v671, %v812
    %v912 = vsub.f32 %v673, %v814
    %v913 = vadd.f32 %v905, 1e-05
    %v914 = vadd.f32 %v906, 1e-05
    %v915 = vadd.f32 %v907, 1e-05
    %v916 = vadd.f32 %v908, 1e-05
    %v917 = vrsqrt.pop %v913
    %v918 = vrsqrt.pop %v914
    %v919 = vrsqrt.pop %v915
    %v920 = vrsqrt.pop %v916
    %v921 = vmul.f32 %v909, %v917
    %v922 = vmul.f32 %v910, %v918
    %v923 = vmul.f32 %v911, %v919
    %v924 = vmul.f32 %v912, %v920
    %v925 = vmax.f32 %v921, 0.0
    %v926 = vmax.f32 %v922, 0.0
    %v927 = vmax.f32 %v923, 0.0
    %v928 = vmax.f32 %v924, 0.0
    %v929 = vld [vmem:[#allocation11] sm:$0xff]
    %v930 = vld [vmem:[#allocation11 + $0x8] sm:$0xff]
    %v931 = vld [vmem:[#allocation11 + $0x10] sm:$0xff]
    %v932 = vld [vmem:[#allocation11 + $0x18] sm:$0xff]
    %v933 = vld [vmem:[#allocation11 + $0x20] sm:$0xff]
    %v934 = vld [vmem:[#allocation11 + $0x28] sm:$0xff]
    %v935 = vld [vmem:[#allocation11 + $0x30] sm:$0xff]
    %v936 = vld [vmem:[#allocation11 + $0x38] sm:$0xff]
    %v937 = vld [vmem:[#allocation11 + $0x40] sm:$0xff]
    %v938 = vld [vmem:[#allocation11 + $0x48] sm:$0xff]
    %v939 = vld [vmem:[#allocation11 + $0x50] sm:$0xff]
    %v940 = vld [vmem:[#allocation11 + $0x58] sm:$0xff]
    %v941 = vld [vmem:[#allocation11 + $0x60] sm:$0xff]
    %v942 = vld [vmem:[#allocation11 + $0x68] sm:$0xff]
    %v943 = vld [vmem:[#allocation11 + $0x70] sm:$0xff]
    %v944 = vld [vmem:[#allocation11 + $0x78] sm:$0xff]
    %v945 = vld [vmem:[#allocation11 + $0x80] sm:$0xff]
    %v946 = vld [vmem:[#allocation11 + $0x88] sm:$0xff]
    %v947 = vld [vmem:[#allocation11 + $0x90] sm:$0xff]
    %v948 = vld [vmem:[#allocation11 + $0x98] sm:$0xff]
    %v949 = vld [vmem:[#allocation11 + $0xa0] sm:$0xff]
    %v950 = vld [vmem:[#allocation11 + $0xa8] sm:$0xff]
    %v951 = vld [vmem:[#allocation11 + $0xb0] sm:$0xff]
    %v952 = vld [vmem:[#allocation11 + $0xb8] sm:$0xff]
    %v953 = vld [vmem:[#allocation11 + $0xc0] sm:$0xff]
    %v954 = vld [vmem:[#allocation11 + $0xc8] sm:$0xff]
    %v955 = vld [vmem:[#allocation11 + $0xd0] sm:$0xff]
    %v956 = vld [vmem:[#allocation11 + $0xd8] sm:$0xff]
    %v957 = vld [vmem:[#allocation11 + $0xe0] sm:$0xff]
    %v958 = vld [vmem:[#allocation11 + $0xe8] sm:$0xff]
    %v959 = vld [vmem:[#allocation11 + $0xf0] sm:$0xff]
    %v960 = vld [vmem:[#allocation11 + $0xf8] sm:$0xff]
    %v961 = vld [vmem:[%s10] sm:$0x1]
    %v963 = vlaneseq
    %v964 = vshrl.u32 %v963, 7
    %v965 = vsub.s32 0, %v964
    %v966 = vrot.slane %v961, %v965
    %968 = vmatprep.subr.mxu0 0.0
    %969 = vmatpush1.msra.mxu0 %v944
    %970 = vmatprep.subr.mxu0 0.0
    %971 = vmatpush1.msra.mxu0 %v943
    %972 = vmatprep.subr.mxu0 0.0
    %973 = vmatpush1.msra.mxu0 %v942
    %974 = vmatprep.subr.mxu0 0.0
    %975 = vmatpush1.msra.mxu0 %v941
    %976 = vmatprep.subr.mxu0 0.0
    %977 = vmatpush1.msra.mxu0 %v940
    %978 = vmatprep.subr.mxu0 0.0
    %979 = vmatpush1.msra.mxu0 %v939
    %980 = vmatprep.subr.mxu0 0.0
    %981 = vmatpush1.msra.mxu0 %v938
    %982 = vmatprep.subr.mxu0 0.0
    %983 = vmatpush1.msra.mxu0 %v937
    %984 = vmatprep.subr.mxu0 0.0
    %985 = vmatpush1.msra.mxu0 %v936
    %986 = vmatprep.subr.mxu0 0.0
    %987 = vmatpush1.msra.mxu0 %v935
    %988 = vmatprep.subr.mxu0 0.0
    %989 = vmatpush1.msra.mxu0 %v934
    %990 = vmatprep.subr.mxu0 0.0
    %991 = vmatpush1.msra.mxu0 %v933
    %992 = vmatprep.subr.mxu0 0.0
    %993 = vmatpush1.msra.mxu0 %v932
    %994 = vmatprep.subr.mxu0 0.0
    %995 = vmatpush1.msra.mxu0 %v931
    %996 = vmatprep.subr.mxu0 0.0
    %997 = vmatpush1.msra.mxu0 %v930
    %998 = vmatprep.subr.mxu0 0.0
    %999 = vmatpush1.msra.mxu0 %v929
    %1000 = vmatprep.subr.mxu0 0.0
    %1001 = vmatpush2.msra.mxu0 %v960
    %1002 = vmatprep.subr.mxu0 0.0
    %1003 = vmatpush2.msra.mxu0 %v959
    %1004 = vmatprep.subr.mxu0 0.0
    %1005 = vmatpush2.msra.mxu0 %v958
    %1006 = vmatprep.subr.mxu0 0.0
    %1007 = vmatpush2.msra.mxu0 %v957
    %1008 = vmatprep.subr.mxu0 0.0
    %1009 = vmatpush2.msra.mxu0 %v956
    %1010 = vmatprep.subr.mxu0 0.0
    %1011 = vmatpush2.msra.mxu0 %v955
    %1012 = vmatprep.subr.mxu0 0.0
    %1013 = vmatpush2.msra.mxu0 %v954
    %1014 = vmatprep.subr.mxu0 0.0
    %1015 = vmatpush2.msra.mxu0 %v953
    %1016 = vmatprep.subr.mxu0 0.0
    %1017 = vmatpush2.msra.mxu0 %v952
    %1018 = vmatprep.subr.mxu0 0.0
    %1019 = vmatpush2.msra.mxu0 %v951
    %1020 = vmatprep.subr.mxu0 0.0
    %1021 = vmatpush2.msra.mxu0 %v950
    %1022 = vmatprep.subr.mxu0 0.0
    %1023 = vmatpush2.msra.mxu0 %v949
    %1024 = vmatprep.subr.mxu0 0.0
    %1025 = vmatpush2.msra.mxu0 %v948
    %1026 = vmatprep.subr.mxu0 0.0
    %1027 = vmatpush2.msra.mxu0 %v947
    %1028 = vmatprep.subr.mxu0 0.0
    %1029 = vmatpush2.msra.mxu0 %v946
    %1030 = vmatprep.subr.mxu0 0.0
    %1031 = vmatpush2.msra.mxu0 %v945
    %1032 = vmatprep.mubr.f32.mxu0 %v926
    %1033 = vmatmul.mubr.f32.gmra.mxu0 %v925
    %v1034 = vpop.f32.mrf.mxu0
    %v1035 = vadd.f32 %v966, %v1034
    %v1036 = vpop.f32.mrf.mxu0
    %1037 = vmatprep.mubr.f32.mxu0 %v928
    %1038 = vmatmul.mubr.f32.gmra.mxu0 %v927
    %v1039 = vpop.f32.mrf.mxu0
    %v1040 = vadd.f32 %v966, %v1039
    %v1041 = vpop.f32.mrf.mxu0
    %1042 = vdwg.mxu0
    %v1043 = vld [vmem:[#allocation16] sm:$0xff]
    %v1044 = vld [vmem:[#allocation16 + $0x8] sm:$0xff]
    %v1045 = vld [vmem:[#allocation16 + $0x10] sm:$0xff]
    %v1046 = vld [vmem:[#allocation16 + $0x18] sm:$0xff]
    %v1047 = vld [vmem:[#allocation16 + $0x20] sm:$0xff]
    %v1048 = vld [vmem:[#allocation16 + $0x28] sm:$0xff]
    %v1049 = vld [vmem:[#allocation16 + $0x30] sm:$0xff]
    %v1050 = vld [vmem:[#allocation16 + $0x38] sm:$0xff]
    %v1051 = vld [vmem:[#allocation16 + $0x40] sm:$0xff]
    %v1052 = vld [vmem:[#allocation16 + $0x48] sm:$0xff]
    %v1053 = vld [vmem:[#allocation16 + $0x50] sm:$0xff]
    %v1054 = vld [vmem:[#allocation16 + $0x58] sm:$0xff]
    %v1055 = vld [vmem:[#allocation16 + $0x60] sm:$0xff]
    %v1056 = vld [vmem:[#allocation16 + $0x68] sm:$0xff]
    %v1057 = vld [vmem:[#allocation16 + $0x70] sm:$0xff]
    %v1058 = vld [vmem:[#allocation16 + $0x78] sm:$0xff]
    %1059 = vmatprep.subr.mxu0 0.0
    %1060 = vmatpush1.msra.mxu0 %v1058
    %1061 = vmatprep.subr.mxu0 0.0
    %1062 = vmatpush1.msra.mxu0 %v1057
    %1063 = vmatprep.subr.mxu0 0.0
    %1064 = vmatpush1.msra.mxu0 %v1056
    %1065 = vmatprep.subr.mxu0 0.0
    %1066 = vmatpush1.msra.mxu0 %v1055
    %1067 = vmatprep.subr.mxu0 0.0
    %1068 = vmatpush1.msra.mxu0 %v1054
    %1069 = vmatprep.subr.mxu0 0.0
    %1070 = vmatpush1.msra.mxu0 %v1053
    %1071 = vmatprep.subr.mxu0 0.0
    %1072 = vmatpush1.msra.mxu0 %v1052
    %1073 = vmatprep.subr.mxu0 0.0
    %1074 = vmatpush1.msra.mxu0 %v1051
    %1075 = vmatprep.subr.mxu0 0.0
    %1076 = vmatpush1.msra.mxu0 %v1050
    %1077 = vmatprep.subr.mxu0 0.0
    %1078 = vmatpush1.msra.mxu0 %v1049
    %1079 = vmatprep.subr.mxu0 0.0
    %1080 = vmatpush1.msra.mxu0 %v1048
    %1081 = vmatprep.subr.mxu0 0.0
    %1082 = vmatpush1.msra.mxu0 %v1047
    %1083 = vmatprep.subr.mxu0 0.0
    %1084 = vmatpush1.msra.mxu0 %v1046
    %1085 = vmatprep.subr.mxu0 0.0
    %1086 = vmatpush1.msra.mxu0 %v1045
    %1087 = vmatprep.subr.mxu0 0.0
    %1088 = vmatpush1.msra.mxu0 %v1044
    %1089 = vmatprep.subr.mxu0 0.0
    %1090 = vmatpush1.msra.mxu0 %v1043
    %1091 = vmatprep.subr.mxu0 0.0
    %1092 = vmatpush2.msra.mxu0 0.0
    %1093 = vmatprep.subr.mxu0 0.0
    %1094 = vmatpush2.msra.mxu0 0.0
    %1095 = vmatprep.subr.mxu0 0.0
    %1096 = vmatpush2.msra.mxu0 0.0
    %1097 = vmatprep.subr.mxu0 0.0
    %1098 = vmatpush2.msra.mxu0 0.0
    %1099 = vmatprep.subr.mxu0 0.0
    %1100 = vmatpush2.msra.mxu0 0.0
    %1101 = vmatprep.subr.mxu0 0.0
    %1102 = vmatpush2.msra.mxu0 0.0
    %1103 = vmatprep.subr.mxu0 0.0
    %1104 = vmatpush2.msra.mxu0 0.0
    %1105 = vmatprep.subr.mxu0 0.0
    %1106 = vmatpush2.msra.mxu0 0.0
    %1107 = vmatprep.subr.mxu0 0.0
    %1108 = vmatpush2.msra.mxu0 0.0
    %1109 = vmatprep.subr.mxu0 0.0
    %1110 = vmatpush2.msra.mxu0 0.0
    %1111 = vmatprep.subr.mxu0 0.0
    %1112 = vmatpush2.msra.mxu0 0.0
    %1113 = vmatprep.subr.mxu0 0.0
    %1114 = vmatpush2.msra.mxu0 0.0
    %1115 = vmatprep.subr.mxu0 0.0
    %1116 = vmatpush2.msra.mxu0 0.0
    %1117 = vmatprep.subr.mxu0 0.0
    %1118 = vmatpush2.msra.mxu0 0.0
    %1119 = vmatprep.subr.mxu0 0.0
    %1120 = vmatpush2.msra.mxu0 0.0
    %1121 = vmatprep.subr.mxu0 0.0
    %1122 = vmatpush2.msra.mxu0 0.0
    %1123 = vmatprep.mubr.f32.mxu0 0.0
    %1124 = vmatmul.mubr.f32.gmra.mxu0 %v1035
    %v1125 = vpop.f32.mrf.mxu0
    %v1126 = vadd.f32 0.0, %v1125
    %v1127 = vpop.f32.mrf.mxu0
    %1128 = vmatprep.mubr.f32.mxu0 0.0
    %1129 = vmatmul.mubr.f32.gmra.mxu0 %v1040
    %v1130 = vpop.f32.mrf.mxu0
    %v1131 = vadd.f32 0.0, %v1130
    %v1132 = vpop.f32.mrf.mxu0
    %1133 = vdwg.mxu0
    %v1134 = vmul.f32 %v1035, %v1035
    %v1135 = vmul.f32 %v1040, %v1040
    %1136 = vmatprep.subr.mxu0 0.0
    %1137 = vmatpush1.msra.mxu0 %v1058
    %1138 = vmatprep.subr.mxu0 0.0
    %1139 = vmatpush1.msra.mxu0 %v1057
    %1140 = vmatprep.subr.mxu0 0.0
    %1141 = vmatpush1.msra.mxu0 %v1056
    %1142 = vmatprep.subr.mxu0 0.0
    %1143 = vmatpush1.msra.mxu0 %v1055
    %1144 = vmatprep.subr.mxu0 0.0
    %1145 = vmatpush1.msra.mxu0 %v1054
    %1146 = vmatprep.subr.mxu0 0.0
    %1147 = vmatpush1.msra.mxu0 %v1053
    %1148 = vmatprep.subr.mxu0 0.0
    %1149 = vmatpush1.msra.mxu0 %v1052
    %1150 = vmatprep.subr.mxu0 0.0
    %1151 = vmatpush1.msra.mxu0 %v1051
    %1152 = vmatprep.subr.mxu0 0.0
    %1153 = vmatpush1.msra.mxu0 %v1050
    %1154 = vmatprep.subr.mxu0 0.0
    %1155 = vmatpush1.msra.mxu0 %v1049
    %1156 = vmatprep.subr.mxu0 0.0
    %1157 = vmatpush1.msra.mxu0 %v1048
    %1158 = vmatprep.subr.mxu0 0.0
    %1159 = vmatpush1.msra.mxu0 %v1047
    %1160 = vmatprep.subr.mxu0 0.0
    %1161 = vmatpush1.msra.mxu0 %v1046
    %1162 = vmatprep.subr.mxu0 0.0
    %1163 = vmatpush1.msra.mxu0 %v1045
    %1164 = vmatprep.subr.mxu0 0.0
    %1165 = vmatpush1.msra.mxu0 %v1044
    %1166 = vmatprep.subr.mxu0 0.0
    %1167 = vmatpush1.msra.mxu0 %v1043
    %1168 = vmatprep.subr.mxu0 0.0
    %1169 = vmatpush2.msra.mxu0 0.0
    %1170 = vmatprep.subr.mxu0 0.0
    %1171 = vmatpush2.msra.mxu0 0.0
    %1172 = vmatprep.subr.mxu0 0.0
    %1173 = vmatpush2.msra.mxu0 0.0
    %1174 = vmatprep.subr.mxu0 0.0
    %1175 = vmatpush2.msra.mxu0 0.0
    %1176 = vmatprep.subr.mxu0 0.0
    %1177 = vmatpush2.msra.mxu0 0.0
    %1178 = vmatprep.subr.mxu0 0.0
    %1179 = vmatpush2.msra.mxu0 0.0
    %1180 = vmatprep.subr.mxu0 0.0
    %1181 = vmatpush2.msra.mxu0 0.0
    %1182 = vmatprep.subr.mxu0 0.0
    %1183 = vmatpush2.msra.mxu0 0.0
    %1184 = vmatprep.subr.mxu0 0.0
    %1185 = vmatpush2.msra.mxu0 0.0
    %1186 = vmatprep.subr.mxu0 0.0
    %1187 = vmatpush2.msra.mxu0 0.0
    %1188 = vmatprep.subr.mxu0 0.0
    %1189 = vmatpush2.msra.mxu0 0.0
    %1190 = vmatprep.subr.mxu0 0.0
    %1191 = vmatpush2.msra.mxu0 0.0
    %1192 = vmatprep.subr.mxu0 0.0
    %1193 = vmatpush2.msra.mxu0 0.0
    %1194 = vmatprep.subr.mxu0 0.0
    %1195 = vmatpush2.msra.mxu0 0.0
    %1196 = vmatprep.subr.mxu0 0.0
    %1197 = vmatpush2.msra.mxu0 0.0
    %1198 = vmatprep.subr.mxu0 0.0
    %1199 = vmatpush2.msra.mxu0 0.0
    %1200 = vmatprep.mubr.f32.mxu0 0.0
    %1201 = vmatmul.mubr.f32.gmra.mxu0 %v1134
    %v1202 = vpop.f32.mrf.mxu0
    %v1203 = vadd.f32 0.0, %v1202
    %v1204 = vpop.f32.mrf.mxu0
    %1205 = vmatprep.mubr.f32.mxu0 0.0
    %1206 = vmatmul.mubr.f32.gmra.mxu0 %v1135
    %v1207 = vpop.f32.mrf.mxu0
    %v1208 = vadd.f32 0.0, %v1207
    %v1209 = vpop.f32.mrf.mxu0
    %1210 = vdwg.mxu0
    %v1211 = vmul.f32 %v1126, %v1126
    %v1212 = vmul.f32 %v1131, %v1131
    %v1213 = vsub.f32 %v1203, %v1211
    %v1214 = vsub.f32 %v1208, %v1212
    %v1215 = vmax.f32 %v1213, 0.0
    %v1216 = vmax.f32 %v1214, 0.0
    %v1217 = vsub.f32 %v1035, %v1126
    %v1218 = vsub.f32 %v1040, %v1131
    %v1219 = vadd.f32 %v1215, 1e-05
    %v1220 = vadd.f32 %v1216, 1e-05
    %v1221 = vrsqrt.pop %v1219
    %v1222 = vrsqrt.pop %v1220
    %v1223 = vmul.f32 %v1217, %v1221
    %v1224 = vmul.f32 %v1218, %v1222
    %v1225 = vmax.f32 %v1223, 0.0
    %v1226 = vmax.f32 %v1224, 0.0
    %v1227 = vmul.f32 %v570, %v1225
    %v1228 = vmul.f32 %v575, %v1226
    %v1229 = vld [vmem:[#allocation13] sm:$0xff]
    %v1230 = vld [vmem:[#allocation13 + $0x8] sm:$0xff]
    %v1231 = vld [vmem:[#allocation13 + $0x10] sm:$0xff]
    %v1232 = vld [vmem:[#allocation13 + $0x18] sm:$0xff]
    %v1233 = vld [vmem:[#allocation13 + $0x20] sm:$0xff]
    %v1234 = vld [vmem:[#allocation13 + $0x28] sm:$0xff]
    %v1235 = vld [vmem:[#allocation13 + $0x30] sm:$0xff]
    %v1236 = vld [vmem:[#allocation13 + $0x38] sm:$0xff]
    %v1237 = vld [vmem:[#allocation13 + $0x40] sm:$0xff]
    %v1238 = vld [vmem:[#allocation13 + $0x48] sm:$0xff]
    %v1239 = vld [vmem:[#allocation13 + $0x50] sm:$0xff]
    %v1240 = vld [vmem:[#allocation13 + $0x58] sm:$0xff]
    %v1241 = vld [vmem:[#allocation13 + $0x60] sm:$0xff]
    %v1242 = vld [vmem:[#allocation13 + $0x68] sm:$0xff]
    %v1243 = vld [vmem:[#allocation13 + $0x70] sm:$0xff]
    %v1244 = vld [vmem:[#allocation13 + $0x78] sm:$0xff]
    %1245 = vmatprep.subr.mxu0 0.0
    %1246 = vmatpush1.msra.mxu0 %v1244
    %1247 = vmatprep.subr.mxu0 0.0
    %1248 = vmatpush1.msra.mxu0 %v1243
    %1249 = vmatprep.subr.mxu0 0.0
    %1250 = vmatpush1.msra.mxu0 %v1242
    %1251 = vmatprep.subr.mxu0 0.0
    %1252 = vmatpush1.msra.mxu0 %v1241
    %1253 = vmatprep.subr.mxu0 0.0
    %1254 = vmatpush1.msra.mxu0 %v1240
    %1255 = vmatprep.subr.mxu0 0.0
    %1256 = vmatpush1.msra.mxu0 %v1239
    %1257 = vmatprep.subr.mxu0 0.0
    %1258 = vmatpush1.msra.mxu0 %v1238
    %1259 = vmatprep.subr.mxu0 0.0
    %1260 = vmatpush1.msra.mxu0 %v1237
    %1261 = vmatprep.subr.mxu0 0.0
    %1262 = vmatpush1.msra.mxu0 %v1236
    %1263 = vmatprep.subr.mxu0 0.0
    %1264 = vmatpush1.msra.mxu0 %v1235
    %1265 = vmatprep.subr.mxu0 0.0
    %1266 = vmatpush1.msra.mxu0 %v1234
    %1267 = vmatprep.subr.mxu0 0.0
    %1268 = vmatpush1.msra.mxu0 %v1233
    %1269 = vmatprep.subr.mxu0 0.0
    %1270 = vmatpush1.msra.mxu0 %v1232
    %1271 = vmatprep.subr.mxu0 0.0
    %1272 = vmatpush1.msra.mxu0 %v1231
    %1273 = vmatprep.subr.mxu0 0.0
    %1274 = vmatpush1.msra.mxu0 %v1230
    %1275 = vmatprep.subr.mxu0 0.0
    %1276 = vmatpush1.msra.mxu0 %v1229
    %1277 = vmatprep.subr.mxu0 0.0
    %1278 = vmatpush2.msra.mxu0 0.0
    %1279 = vmatprep.subr.mxu0 0.0
    %1280 = vmatpush2.msra.mxu0 0.0
    %1281 = vmatprep.subr.mxu0 0.0
    %1282 = vmatpush2.msra.mxu0 0.0
    %1283 = vmatprep.subr.mxu0 0.0
    %1284 = vmatpush2.msra.mxu0 0.0
    %1285 = vmatprep.subr.mxu0 0.0
    %1286 = vmatpush2.msra.mxu0 0.0
    %1287 = vmatprep.subr.mxu0 0.0
    %1288 = vmatpush2.msra.mxu0 0.0
    %1289 = vmatprep.subr.mxu0 0.0
    %1290 = vmatpush2.msra.mxu0 0.0
    %1291 = vmatprep.subr.mxu0 0.0
    %1292 = vmatpush2.msra.mxu0 0.0
    %1293 = vmatprep.subr.mxu0 0.0
    %1294 = vmatpush2.msra.mxu0 0.0
    %1295 = vmatprep.subr.mxu0 0.0
    %1296 = vmatpush2.msra.mxu0 0.0
    %1297 = vmatprep.subr.mxu0 0.0
    %1298 = vmatpush2.msra.mxu0 0.0
    %1299 = vmatprep.subr.mxu0 0.0
    %1300 = vmatpush2.msra.mxu0 0.0
    %1301 = vmatprep.subr.mxu0 0.0
    %1302 = vmatpush2.msra.mxu0 0.0
    %1303 = vmatprep.subr.mxu0 0.0
    %1304 = vmatpush2.msra.mxu0 0.0
    %1305 = vmatprep.subr.mxu0 0.0
    %1306 = vmatpush2.msra.mxu0 0.0
    %1307 = vmatprep.subr.mxu0 0.0
    %1308 = vmatpush2.msra.mxu0 0.0
    %1309 = vmatprep.mubr.f32.mxu0 0.0
    %1310 = vmatmul.mubr.f32.gmra.mxu0 %v1227
    %v1311 = vpop.f32.mrf.mxu0
    %v1312 = vadd.f32 %v456, %v1311
    %v1313 = vpop.f32.mrf.mxu0
    %1314 = vmatprep.mubr.f32.mxu0 0.0
    %1315 = vmatmul.mubr.f32.gmra.mxu0 %v1228
    %v1316 = vpop.f32.mrf.mxu0
    %v1317 = vadd.f32 %v461, %v1316
    %v1318 = vpop.f32.mrf.mxu0
    %1319 = vdwg.mxu0
    %1320 = vst [vmem:[#allocation17] sm:$0xff] %v1312
    %1321 = vst [vmem:[#allocation17 + $0x8] sm:$0xff] %v1317
    // Predicated region
    $region94: #{tpu_custom_call.1} parent=1 // pred_check
      _
    $region95: #{tpu_custom_call.1} parent=1 // pred_check_branch
      %1323 = sbr.rel (0) target = $region97
    $region96: #{tpu_custom_call.1} parent=1 // pred_region
      %s1325 = ssub.s32 256, 256
      %1326 = vsyncadd [#allocation4], %s1325
      %s1327 = sshll.u32 [#allocation17], 4
      %s1328 = int_to_ptr.vmem [resolvable:$true] %s1327
      %1333 = dma.vmem_to_hbm [thread:$0]  %s1328, 256, %s14, [#allocation4], 128, 128, 8
    $region97: #{tpu_custom_call.1} parent=1 // pred_fallthru
      _
    // Predicated region
    $region98: #{tpu_custom_call.1} parent=1 // pred_check
      _
    $region99: #{tpu_custom_call.1} parent=1 // pred_check_branch
      %1335 = sbr.rel (0) target = $region101
    $region100: #{tpu_custom_call.1} parent=1 // pred_region
      %1336 = dma.done [#allocation4], 256
    $region101: #{tpu_custom_call.1} parent=1 // pred_fallthru
      _
    %1337 = vsyncpa [#allocation3], 1
    %1338 = vsyncpa [#allocation6], 1
    %1339 = vsyncpa [#allocation9], 1
    %1340 = vsyncpa [#allocation12], 1
    %1341 = vsyncpa [#allocation15], 1
    %1342 = vsyncpa [#allocation4], 1

</llo_original>
